<compile_context>
chip_gen: v6e
topology: v6e:2x2x1
jax: 0.10.0
libtpu: 0.0.40
codegen_flags: <defaults>
</compile_context>

<pallas_src>
import jax
import jax.numpy as jnp
from jax.experimental import pallas as pl
from jax.experimental.pallas import tpu as pltpu


# --------------------------------------------------------------------------- #
# helpers
# --------------------------------------------------------------------------- #
def _vmem_padded_bytes(shape, itemsize=4):
    """f32 VMEM footprint of an array with (8,128) tiling on the last two dims."""
    s = list(shape)
    if len(s) >= 2:
        s[-2] = ((s[-2] + 7) // 8) * 8
    s[-1] = ((s[-1] + 127) // 128) * 128
    n = 1
    for d in s:
        n *= int(d)
    return n * itemsize


def _largest_divisor_leq(n, cap):
    cap = max(1, min(int(cap), int(n)))
    for d in range(cap, 0, -1):
        if n % d == 0:
            return d
    return 1


def _tpu_chip_info():
    """Generation-aware VMEM limit and 2-TensorCore (megacore) detection."""
    mib = 1024 * 1024
    vmem_cap = None
    try:
        cap = int(pltpu.get_tpu_info().vmem_capacity_bytes)
        if cap > 0:
            vmem_cap = cap
    except Exception:
        vmem_cap = None
    kind = ""
    try:
        kind = jax.devices()[0].device_kind.lower()
    except Exception:
        kind = ""

    # Conservative default (ran clean previously); upgrade only on evidence.
    vmem_limit = 32 * mib
    if vmem_cap is not None:
        vmem_limit = max(32 * mib, min(int(vmem_cap * 0.75), 112 * mib))
    elif any(t in kind for t in ("v5e", "v5 lite", "v5litepod", "v6e", "v6 lite", "v5p", "v4")):
        vmem_limit = 96 * mib      # 128-MiB VMEM chips
    elif "v7" in kind or "7x" in kind:
        vmem_limit = 48 * mib      # 64-MiB/TC chips

    # 2 TensorCores per chip (grid "parallel" axis sharded across cores).
    megacore = any(t in kind for t in ("v4", "v5p", "v7", "7x"))
    if any(t in kind for t in ("lite", "v5e", "v6e")):
        megacore = False
    return {"vmem_limit": int(vmem_limit), "megacore": bool(megacore)}


# --------------------------------------------------------------------------- #
# kernels
# --------------------------------------------------------------------------- #
def _make_resident_kernel(nblk, sblk, bc):
    """Whole recurrence for one batch chunk, fully unrolled, VMEM resident.

    ainv_ref: (1, nblk, sblk, L)   packed A_i^{-1}  [j on sublanes, (r,b) on lanes]
    cp_ref:   (1, nblk, sblk, L)   packed C_{i-1}   (row 0 is zeros, skipped)
    vt_ref:   (1, nblk, sblk, bc)  v blocks, j on sublanes, b on lanes
    y_ref:    (1, nblk, L)         packed solution, lane-dense rows
    w_ref:    (nblk, L)            VMEM scratch for the hoisted presolve
    """
    L = sblk * bc

    def kernel(ainv_ref, cp_ref, vt_ref, y_ref, w_ref):
        # --- hoisted, carry-independent presolve: w_i = A_i^{-1} v_i ----------
        # Done per block into a VMEM scratch slab so live vreg ranges stay
        # bounded; every op is lane-dense with the contraction on sublanes.
        for i in range(nblk):
            vexp = jnp.concatenate([vt_ref[0, i]] * sblk, axis=-1)        # (sblk, L)
            w_ref[pl.ds(i, 1), :] = jnp.sum(
                ainv_ref[0, i] * vexp, axis=0, keepdims=True)             # (1, L)

        # --- serial recurrence: y_i = w_i - C_{i-1} y_{i-1} -------------------
        y = w_ref[pl.ds(0, 1), :]                                         # (1, L)
        y_ref[0, pl.ds(0, 1), :] = y
        for i in range(1, nblk):
            # relayout previous row (lane layout (r,b)) to (sblk, bc): static
            # lane slices stacked on sublanes.
            yT = jnp.concatenate(
                [y[:, k * bc:(k + 1) * bc] for k in range(sblk)], axis=0)  # (sblk, bc)
            yexp = jnp.concatenate([yT] * sblk, axis=-1)                   # (sblk, L)
            y = w_ref[pl.ds(i, 1), :] - jnp.sum(
                cp_ref[0, i] * yexp, axis=0, keepdims=True)                # (1, L)
            y_ref[0, pl.ds(i, 1), :] = y                                   # lane-dense row

    return kernel


def _make_resident_single_kernel(sblk):
    """nblk == 1: y = A^{-1} v, no C operand at all."""

    def kernel(ainv_ref, vt_ref, y_ref):
        vexp = jnp.concatenate([vt_ref[0, 0]] * sblk, axis=-1)
        y_ref[0, pl.ds(0, 1), :] = jnp.sum(ainv_ref[0, 0] * vexp, axis=0, keepdims=True)

    return kernel


def _make_pipelined_kernel(U, sblk, bc):
    """Streamed fallback: U blocks per grid step, fused A^{-1}v presolve.

    ainv_ref: (1, U, sblk, L)
    cp_ref:   (1, U, sblk, L)   (global block 0 is the zero pad -> subtracts 0)
    vt_ref:   (1, U, sblk, bc)
    y_ref:    (1, 1, U, L)
    yT_ref:   (sblk, bc)        carried y_{i-1}, persists across grid steps
    """
    L = sblk * bc

    def kernel(ainv_ref, cp_ref, vt_ref, y_ref, yT_ref):
        s = pl.program_id(1)

        @pl.when(s == 0)
        def _():
            yT_ref[...] = jnp.zeros_like(yT_ref)   # fresh carry per batch chunk

        for u in range(U):
            # carry-independent part (overlaps with the C stream)
            vexp = jnp.concatenate([vt_ref[0, u]] * sblk, axis=-1)            # (sblk, L)
            w_u = jnp.sum(ainv_ref[0, u] * vexp, axis=0, keepdims=True)       # (1, L)
            # carried matvec
            yT = yT_ref[...]
            yexp = jnp.concatenate([yT] * sblk, axis=-1)                      # (sblk, L)
            y_u = w_u - jnp.sum(cp_ref[0, u] * yexp, axis=0, keepdims=True)   # (1, L)
            y_ref[0, 0, pl.ds(u, 1), :] = y_u                                  # lane-dense row
            yT_ref[...] = jnp.concatenate(
                [y_u[:, k * bc:(k + 1) * bc] for k in range(sblk)], axis=0)

    return kernel


# --------------------------------------------------------------------------- #
# module
# --------------------------------------------------------------------------- #
class LUFactorization:
    """JAX/Pallas port of pyzag.chunktime.LUFactorization.

    A: (nblk, sbat, sblk, sblk) main-diagonal blocks
    B: (nblk-1, sbat, sblk, sblk) first lower-diagonal blocks
    forward(v): v of shape (sbat, nblk*sblk) -> y of shape (sbat, nblk*sblk)
    """

    _RESIDENT_MAX_NBLK = 64   # bounds the fully-unrolled kernel's code size

    def __init__(self, A, B):
        A = jnp.asarray(A, jnp.float32)
        B = jnp.asarray(B, jnp.float32)
        self.nblk, self.sbat, self.sblk = int(A.shape[0]), int(A.shape[1]), int(A.shape[2])

        info = _tpu_chip_info()
        self._vmem_limit = info["vmem_limit"]
        self._resident_budget = int(0.8 * self._vmem_limit)
        # Batch chunking only pays off when the chip has 2 TensorCores.
        self.nchunks = 2 if (info["megacore"] and self.sbat % 2 == 0 and self.sbat >= 2) else 1
        self.bc = self.sbat // self.nchunks
        L = self.sblk * self.bc

        # TODO(synk): torch.linalg.lu_factor_ex (pivoted LU) has no clean Pallas
        # equivalent; A^{-1} (and C = A^{-1} B) are formed with plain JAX at
        # setup time -- apply-semantics identical, numerically weaker for
        # ill-conditioned diagonal blocks.
        Ainv = jnp.linalg.inv(A)
        self.Ainv = Ainv                       # kept for reference checks
        self.AinvP = self._pack(Ainv)          # (nchunks, nblk, sblk, L)

        if self.nblk > 1:
            # C_i = A_{i+1}^{-1} B_i  (setup-time XLA matmul; one carried matvec
            # per block in the recurrence).
            C = jnp.einsum("nbij,nbjk->nbik", Ainv[1:], B)
            CPcore = self._pack(C)             # (nchunks, nblk-1, sblk, L)
            zero = jnp.zeros((self.nchunks, 1, self.sblk, L), jnp.float32)
            # Leading zero block keeps the streamed path's indexing aligned;
            # the resident kernel statically skips row 0.
            self.CPfull = jnp.concatenate([zero, CPcore], axis=1)
        else:
            self.CPfull = None                 # no dummy C operand for nblk == 1

    # ------------------------------------------------------------- packing ---
    def _pack(self, M):
        """(nb, sbat, sblk_r, sblk_j) -> (nchunks, nb, sblk_j, sblk_r * bc)."""
        nb = M.shape[0]
        return (
            M.reshape(nb, self.nchunks, self.bc, self.sblk, self.sblk)
             .transpose(1, 0, 4, 3, 2)
             .reshape(self.nchunks, nb, self.sblk, self.sblk * self.bc)
        )

    def _pack_v(self, v):
        """(sbat, nblk*sblk) -> (nchunks, nblk, sblk_j, bc)."""
        return (
            v.reshape(self.nchunks, self.bc, self.nblk, self.sblk)
             .transpose(0, 2, 3, 1)
        )

    def _unpack_y(self, yP):
        """(nchunks, nblk, sblk*bc) -> (sbat, nblk*sblk)."""
        return (
            yP.reshape(self.nchunks, self.nblk, self.sblk, self.bc)
              .transpose(0, 3, 1, 2)
              .reshape(self.sbat, self.nblk * self.sblk)
        )

    # ------------------------------------------------------------- sizing ----
    def _resident_vmem_bytes(self):
        L = self.sblk * self.bc
        ainv = _vmem_padded_bytes((1, self.nblk, self.sblk, L))
        cp = ainv if self.nblk > 1 else 0
        vt = _vmem_padded_bytes((1, self.nblk, self.sblk, self.bc))
        y = _vmem_padded_bytes((1, self.nblk, L))
        w = _vmem_padded_bytes((self.nblk, L))
        temps = 4 * _vmem_padded_bytes((self.sblk, L))
        # in/out blocks are double-buffered by the pipeline; scratch is not.
        return 2 * (ainv + cp + vt + y) + w + temps

    # ----------------------------------------------------------- main path ---
    def _forward_resident(self, v):
        nblk, sblk, nchunks, bc = self.nblk, self.sblk, self.nchunks, self.bc
        L = sblk * bc
        vP = self._pack_v(v)

        if nblk == 1:
            kernel = _make_resident_single_kernel(sblk)
            operands = (self.AinvP, vP)
            in_specs = [
                pl.BlockSpec((1, nblk, sblk, L), lambda c: (c, 0, 0, 0)),
                pl.BlockSpec((1, nblk, sblk, bc), lambda c: (c, 0, 0, 0)),
            ]
            scratch = []
        else:
            kernel = _make_resident_kernel(nblk, sblk, bc)
            operands = (self.AinvP, self.CPfull, vP)
            in_specs = [
                pl.BlockSpec((1, nblk, sblk, L), lambda c: (c, 0, 0, 0)),   # AinvP
                pl.BlockSpec((1, nblk, sblk, L), lambda c: (c, 0, 0, 0)),   # CPfull
                pl.BlockSpec((1, nblk, sblk, bc), lambda c: (c, 0, 0, 0)),  # vP
            ]
            scratch = [pltpu.VMEM((nblk, L), jnp.float32)]                  # w slab

        yP = pl.pallas_call(
            kernel,
            out_shape=jax.ShapeDtypeStruct((nchunks, nblk, L), jnp.float32),
            grid_spec=pltpu.PrefetchScalarGridSpec(
                num_scalar_prefetch=0,
                grid=(nchunks,),
                in_specs=in_specs,
                out_specs=pl.BlockSpec((1, nblk, L), lambda c: (c, 0, 0)),
                scratch_shapes=scratch,
            ),
            compiler_params=pltpu.CompilerParams(
                dimension_semantics=("parallel",),      # batch chunks independent
                vmem_limit_bytes=self._vmem_limit,
            ),
        )(*operands)
        return self._unpack_y(yP)

    # ------------------------------------------------------- fallback path ---
    def _forward_pipelined(self, v, unroll=None):
        nblk, sblk, nchunks, bc = self.nblk, self.sblk, self.nchunks, self.bc
        L = sblk * bc
        U = _largest_divisor_leq(nblk, unroll if unroll else 8)
        nsteps = nblk // U
        vP = self._pack_v(v)

        kernel = _make_pipelined_kernel(U, sblk, bc)
        yP4 = pl.pallas_call(
            kernel,
            out_shape=jax.ShapeDtypeStruct((nchunks, nsteps, U, L), jnp.float32),
            grid_spec=pltpu.PrefetchScalarGridSpec(
                num_scalar_prefetch=0,
                grid=(nchunks, nsteps),
                in_specs=[
                    pl.BlockSpec((1, U, sblk, L), lambda c, s: (c, s, 0, 0)),   # AinvP
                    pl.BlockSpec((1, U, sblk, L), lambda c, s: (c, s, 0, 0)),   # CPfull
                    pl.BlockSpec((1, U, sblk, bc), lambda c, s: (c, s, 0, 0)),  # vP
                ],
                out_specs=pl.BlockSpec((1, 1, U, L), lambda c, s: (c, s, 0, 0)),
                scratch_shapes=[pltpu.VMEM((sblk, bc), jnp.float32)],           # y carry
            ),
            compiler_params=pltpu.CompilerParams(
                dimension_semantics=("parallel", "arbitrary"),  # serial over blocks
                vmem_limit_bytes=self._vmem_limit,
            ),
        )(self.AinvP, self.CPfull, vP)
        return self._unpack_y(yP4.reshape(nchunks, nblk, L))

    # --------------------------------------------------------------- public ---
    def forward(self, v, *, force_path=None, pipeline_unroll=None):
        v = jnp.asarray(v, jnp.float32)
        if self.nblk == 1:
            return self._forward_resident(v)
        if force_path == "resident":
            use_resident = True
        elif force_path == "pipelined":
            use_resident = False
        else:
            use_resident = (
                self.nblk <= self._RESIDENT_MAX_NBLK
                and self._resident_vmem_bytes() <= self._resident_budget
            )
        if use_resident:
            return self._forward_resident(v)
        return self._forward_pipelined(v, unroll=pipeline_unroll)

    matvec = forward   # torch module's forward delegates to matvec


# --------------------------------------------------------------------------- #
# self test
# --------------------------------------------------------------------------- #
if __name__ == "__main__":
    key = jax.random.PRNGKey(0)
    nblk, sbat, sblk = 8, 4, 8
    kA, kB, kv = jax.random.split(key, 3)

    # Deterministic, well-conditioned (diagonally dominant) diagonal blocks.
    A = (
        jax.random.normal(kA, (nblk, sbat, sblk, sblk), jnp.float32) * 0.1
        + jnp.eye(sblk, dtype=jnp.float32)
    )
    B = jax.random.normal(kB, (nblk - 1, sbat, sblk, sblk), jnp.float32) * 0.1
    v = jax.random.normal(kv, (sbat, nblk * sblk), jnp.float32)

    op = LUFactorization(A, B)
    y = jax.block_until_ready(op.forward(v))                                   # resident path
    y_pipe = jax.block_until_ready(
        op.forward(v, force_path="pipelined", pipeline_unroll=2))              # streamed path

    # Pure-JAX reference: block forward substitution with the same A^{-1}.
    vb = v.reshape(sbat, nblk, sblk).transpose(1, 0, 2)
    yp = jnp.einsum("bij,bj->bi", op.Ainv[0], vb[0])
    ys = [yp]
    for i in range(1, nblk):
        r = vb[i] - jnp.einsum("bij,bj->bi", B[i - 1], yp)
        yp = jnp.einsum("bij,bj->bi", op.Ainv[i], r)
        ys.append(yp)
    y_ref = jnp.stack(ys, 0).transpose(1, 0, 2).reshape(sbat, nblk * sblk)

    assert jnp.allclose(y, y_ref, rtol=1e-4, atol=1e-4), float(
        jnp.max(jnp.abs(y - y_ref)))
    assert jnp.allclose(y_pipe, y_ref, rtol=1e-4, atol=1e-4), float(
        jnp.max(jnp.abs(y_pipe - y_ref)))
    print("KERNEL_OK")
</pallas_src>

<mosaic_0001>
module attributes {stable_mosaic.version = 11 : i64} {
  func.func @kernel(%arg0: i32, %arg1: memref<1x8x8x32xf32, #tpu.memory_space<vmem>>, %arg2: memref<1x8x8x32xf32, #tpu.memory_space<vmem>>, %arg3: memref<1x8x8x4xf32, #tpu.memory_space<vmem>>, %arg4: memref<1x8x32xf32, #tpu.memory_space<vmem>>, %arg5: memref<8x32xf32, #tpu.memory_space<vmem>>) attributes {dimension_semantics = [#tpu.dimension_semantics<parallel>], iteration_bounds = array<i64: 1>, scalar_prefetch = 0 : i64, scratch_operands = 1 : i64, tpu.core_type = #tpu.core_type<tc>, window_params = [{transform_indices = @transform_0, window_bounds = array<i64: 1, 8, 8, 32>}, {transform_indices = @transform_1, window_bounds = array<i64: 1, 8, 8, 32>}, {transform_indices = @transform_2, window_bounds = array<i64: 1, 8, 8, 4>}, {transform_indices = @transform_3, window_bounds = array<i64: 1, 8, 32>}]} {
    %c0 = arith.constant 0 : index
    %c0_0 = arith.constant 0 : index
    %c0_1 = arith.constant 0 : index
    %c0_2 = arith.constant 0 : index
    %0 = vector.load %arg3[%c0, %c0_0, %c0_1, %c0_2] : memref<1x8x8x4xf32, #tpu.memory_space<vmem>>, vector<1x1x8x4xf32>
    %1 = vector.shape_cast %0 : vector<1x1x8x4xf32> to vector<8x4xf32>
    %2 = tpu.concatenate %1, %1, %1, %1, %1, %1, %1, %1 in 1 : vector<8x4xf32>, vector<8x4xf32>, vector<8x4xf32>, vector<8x4xf32>, vector<8x4xf32>, vector<8x4xf32>, vector<8x4xf32>, vector<8x4xf32> -> vector<8x32xf32>
    %c0_3 = arith.constant 0 : index
    %c0_4 = arith.constant 0 : index
    %c0_5 = arith.constant 0 : index
    %c0_6 = arith.constant 0 : index
    %3 = vector.load %arg1[%c0_3, %c0_4, %c0_5, %c0_6] : memref<1x8x8x32xf32, #tpu.memory_space<vmem>>, vector<1x1x8x32xf32>
    %4 = vector.shape_cast %3 : vector<1x1x8x32xf32> to vector<8x32xf32>
    %5 = arith.mulf %4, %2 : vector<8x32xf32>
    %cst = arith.constant dense<0.000000e+00> : vector<32xf32>
    %6 = vector.multi_reduction <add>, %5, %cst [0] : vector<8x32xf32> to vector<32xf32>
    %7 = vector.shape_cast %6 : vector<32xf32> to vector<1x32xf32>
    %c0_7 = arith.constant 0 : index
    %c0_8 = arith.constant 0 : index
    %8 = vector.load %arg5[%c0_7, %c0_8] : memref<8x32xf32, #tpu.memory_space<vmem>>, vector<1x32xf32>
    tpu.vector_store %arg5[%c0_7, %c0_8], %7 {strides = array<i32>} : memref<8x32xf32, #tpu.memory_space<vmem>>, vector<1x32xf32>,
    %c0_9 = arith.constant 0 : index
    %c1 = arith.constant 1 : index
    %c0_10 = arith.constant 0 : index
    %c0_11 = arith.constant 0 : index
    %9 = vector.load %arg3[%c0_9, %c1, %c0_10, %c0_11] : memref<1x8x8x4xf32, #tpu.memory_space<vmem>>, vector<1x1x8x4xf32>
    %10 = vector.shape_cast %9 : vector<1x1x8x4xf32> to vector<8x4xf32>
    %11 = tpu.concatenate %10, %10, %10, %10, %10, %10, %10, %10 in 1 : vector<8x4xf32>, vector<8x4xf32>, vector<8x4xf32>, vector<8x4xf32>, vector<8x4xf32>, vector<8x4xf32>, vector<8x4xf32>, vector<8x4xf32> -> vector<8x32xf32>
    %c0_12 = arith.constant 0 : index
    %c1_13 = arith.constant 1 : index
    %c0_14 = arith.constant 0 : index
    %c0_15 = arith.constant 0 : index
    %12 = vector.load %arg1[%c0_12, %c1_13, %c0_14, %c0_15] : memref<1x8x8x32xf32, #tpu.memory_space<vmem>>, vector<1x1x8x32xf32>
    %13 = vector.shape_cast %12 : vector<1x1x8x32xf32> to vector<8x32xf32>
    %14 = arith.mulf %13, %11 : vector<8x32xf32>
    %cst_16 = arith.constant dense<0.000000e+00> : vector<32xf32>
    %15 = vector.multi_reduction <add>, %14, %cst_16 [0] : vector<8x32xf32> to vector<32xf32>
    %16 = vector.shape_cast %15 : vector<32xf32> to vector<1x32xf32>
    %c1_17 = arith.constant 1 : index
    %c0_18 = arith.constant 0 : index
    %17 = vector.load %arg5[%c1_17, %c0_18] : memref<8x32xf32, #tpu.memory_space<vmem>>, vector<1x32xf32>
    tpu.vector_store %arg5[%c1_17, %c0_18], %16 {strides = array<i32>} : memref<8x32xf32, #tpu.memory_space<vmem>>, vector<1x32xf32>,
    %c0_19 = arith.constant 0 : index
    %c2 = arith.constant 2 : index
    %c0_20 = arith.constant 0 : index
    %c0_21 = arith.constant 0 : index
    %18 = vector.load %arg3[%c0_19, %c2, %c0_20, %c0_21] : memref<1x8x8x4xf32, #tpu.memory_space<vmem>>, vector<1x1x8x4xf32>
    %19 = vector.shape_cast %18 : vector<1x1x8x4xf32> to vector<8x4xf32>
    %20 = tpu.concatenate %19, %19, %19, %19, %19, %19, %19, %19 in 1 : vector<8x4xf32>, vector<8x4xf32>, vector<8x4xf32>, vector<8x4xf32>, vector<8x4xf32>, vector<8x4xf32>, vector<8x4xf32>, vector<8x4xf32> -> vector<8x32xf32>
    %c0_22 = arith.constant 0 : index
    %c2_23 = arith.constant 2 : index
    %c0_24 = arith.constant 0 : index
    %c0_25 = arith.constant 0 : index
    %21 = vector.load %arg1[%c0_22, %c2_23, %c0_24, %c0_25] : memref<1x8x8x32xf32, #tpu.memory_space<vmem>>, vector<1x1x8x32xf32>
    %22 = vector.shape_cast %21 : vector<1x1x8x32xf32> to vector<8x32xf32>
    %23 = arith.mulf %22, %20 : vector<8x32xf32>
    %cst_26 = arith.constant dense<0.000000e+00> : vector<32xf32>
    %24 = vector.multi_reduction <add>, %23, %cst_26 [0] : vector<8x32xf32> to vector<32xf32>
    %25 = vector.shape_cast %24 : vector<32xf32> to vector<1x32xf32>
    %c2_27 = arith.constant 2 : index
    %c0_28 = arith.constant 0 : index
    %26 = vector.load %arg5[%c2_27, %c0_28] : memref<8x32xf32, #tpu.memory_space<vmem>>, vector<1x32xf32>
    tpu.vector_store %arg5[%c2_27, %c0_28], %25 {strides = array<i32>} : memref<8x32xf32, #tpu.memory_space<vmem>>, vector<1x32xf32>,
    %c0_29 = arith.constant 0 : index
    %c3 = arith.constant 3 : index
    %c0_30 = arith.constant 0 : index
    %c0_31 = arith.constant 0 : index
    %27 = vector.load %arg3[%c0_29, %c3, %c0_30, %c0_31] : memref<1x8x8x4xf32, #tpu.memory_space<vmem>>, vector<1x1x8x4xf32>
    %28 = vector.shape_cast %27 : vector<1x1x8x4xf32> to vector<8x4xf32>
    %29 = tpu.concatenate %28, %28, %28, %28, %28, %28, %28, %28 in 1 : vector<8x4xf32>, vector<8x4xf32>, vector<8x4xf32>, vector<8x4xf32>, vector<8x4xf32>, vector<8x4xf32>, vector<8x4xf32>, vector<8x4xf32> -> vector<8x32xf32>
    %c0_32 = arith.constant 0 : index
    %c3_33 = arith.constant 3 : index
    %c0_34 = arith.constant 0 : index
    %c0_35 = arith.constant 0 : index
    %30 = vector.load %arg1[%c0_32, %c3_33, %c0_34, %c0_35] : memref<1x8x8x32xf32, #tpu.memory_space<vmem>>, vector<1x1x8x32xf32>
    %31 = vector.shape_cast %30 : vector<1x1x8x32xf32> to vector<8x32xf32>
    %32 = arith.mulf %31, %29 : vector<8x32xf32>
    %cst_36 = arith.constant dense<0.000000e+00> : vector<32xf32>
    %33 = vector.multi_reduction <add>, %32, %cst_36 [0] : vector<8x32xf32> to vector<32xf32>
    %34 = vector.shape_cast %33 : vector<32xf32> to vector<1x32xf32>
    %c3_37 = arith.constant 3 : index
    %c0_38 = arith.constant 0 : index
    %35 = vector.load %arg5[%c3_37, %c0_38] : memref<8x32xf32, #tpu.memory_space<vmem>>, vector<1x32xf32>
    tpu.vector_store %arg5[%c3_37, %c0_38], %34 {strides = array<i32>} : memref<8x32xf32, #tpu.memory_space<vmem>>, vector<1x32xf32>,
    %c0_39 = arith.constant 0 : index
    %c4 = arith.constant 4 : index
    %c0_40 = arith.constant 0 : index
    %c0_41 = arith.constant 0 : index
    %36 = vector.load %arg3[%c0_39, %c4, %c0_40, %c0_41] : memref<1x8x8x4xf32, #tpu.memory_space<vmem>>, vector<1x1x8x4xf32>
    %37 = vector.shape_cast %36 : vector<1x1x8x4xf32> to vector<8x4xf32>
    %38 = tpu.concatenate %37, %37, %37, %37, %37, %37, %37, %37 in 1 : vector<8x4xf32>, vector<8x4xf32>, vector<8x4xf32>, vector<8x4xf32>, vector<8x4xf32>, vector<8x4xf32>, vector<8x4xf32>, vector<8x4xf32> -> vector<8x32xf32>
    %c0_42 = arith.constant 0 : index
    %c4_43 = arith.constant 4 : index
    %c0_44 = arith.constant 0 : index
    %c0_45 = arith.constant 0 : index
    %39 = vector.load %arg1[%c0_42, %c4_43, %c0_44, %c0_45] : memref<1x8x8x32xf32, #tpu.memory_space<vmem>>, vector<1x1x8x32xf32>
    %40 = vector.shape_cast %39 : vector<1x1x8x32xf32> to vector<8x32xf32>
    %41 = arith.mulf %40, %38 : vector<8x32xf32>
    %cst_46 = arith.constant dense<0.000000e+00> : vector<32xf32>
    %42 = vector.multi_reduction <add>, %41, %cst_46 [0] : vector<8x32xf32> to vector<32xf32>
    %43 = vector.shape_cast %42 : vector<32xf32> to vector<1x32xf32>
    %c4_47 = arith.constant 4 : index
    %c0_48 = arith.constant 0 : index
    %44 = vector.load %arg5[%c4_47, %c0_48] : memref<8x32xf32, #tpu.memory_space<vmem>>, vector<1x32xf32>
    tpu.vector_store %arg5[%c4_47, %c0_48], %43 {strides = array<i32>} : memref<8x32xf32, #tpu.memory_space<vmem>>, vector<1x32xf32>,
    %c0_49 = arith.constant 0 : index
    %c5 = arith.constant 5 : index
    %c0_50 = arith.constant 0 : index
    %c0_51 = arith.constant 0 : index
    %45 = vector.load %arg3[%c0_49, %c5, %c0_50, %c0_51] : memref<1x8x8x4xf32, #tpu.memory_space<vmem>>, vector<1x1x8x4xf32>
    %46 = vector.shape_cast %45 : vector<1x1x8x4xf32> to vector<8x4xf32>
    %47 = tpu.concatenate %46, %46, %46, %46, %46, %46, %46, %46 in 1 : vector<8x4xf32>, vector<8x4xf32>, vector<8x4xf32>, vector<8x4xf32>, vector<8x4xf32>, vector<8x4xf32>, vector<8x4xf32>, vector<8x4xf32> -> vector<8x32xf32>
    %c0_52 = arith.constant 0 : index
    %c5_53 = arith.constant 5 : index
    %c0_54 = arith.constant 0 : index
    %c0_55 = arith.constant 0 : index
    %48 = vector.load %arg1[%c0_52, %c5_53, %c0_54, %c0_55] : memref<1x8x8x32xf32, #tpu.memory_space<vmem>>, vector<1x1x8x32xf32>
    %49 = vector.shape_cast %48 : vector<1x1x8x32xf32> to vector<8x32xf32>
    %50 = arith.mulf %49, %47 : vector<8x32xf32>
    %cst_56 = arith.constant dense<0.000000e+00> : vector<32xf32>
    %51 = vector.multi_reduction <add>, %50, %cst_56 [0] : vector<8x32xf32> to vector<32xf32>
    %52 = vector.shape_cast %51 : vector<32xf32> to vector<1x32xf32>
    %c5_57 = arith.constant 5 : index
    %c0_58 = arith.constant 0 : index
    %53 = vector.load %arg5[%c5_57, %c0_58] : memref<8x32xf32, #tpu.memory_space<vmem>>, vector<1x32xf32>
    tpu.vector_store %arg5[%c5_57, %c0_58], %52 {strides = array<i32>} : memref<8x32xf32, #tpu.memory_space<vmem>>, vector<1x32xf32>,
    %c0_59 = arith.constant 0 : index
    %c6 = arith.constant 6 : index
    %c0_60 = arith.constant 0 : index
    %c0_61 = arith.constant 0 : index
    %54 = vector.load %arg3[%c0_59, %c6, %c0_60, %c0_61] : memref<1x8x8x4xf32, #tpu.memory_space<vmem>>, vector<1x1x8x4xf32>
    %55 = vector.shape_cast %54 : vector<1x1x8x4xf32> to vector<8x4xf32>
    %56 = tpu.concatenate %55, %55, %55, %55, %55, %55, %55, %55 in 1 : vector<8x4xf32>, vector<8x4xf32>, vector<8x4xf32>, vector<8x4xf32>, vector<8x4xf32>, vector<8x4xf32>, vector<8x4xf32>, vector<8x4xf32> -> vector<8x32xf32>
    %c0_62 = arith.constant 0 : index
    %c6_63 = arith.constant 6 : index
    %c0_64 = arith.constant 0 : index
    %c0_65 = arith.constant 0 : index
    %57 = vector.load %arg1[%c0_62, %c6_63, %c0_64, %c0_65] : memref<1x8x8x32xf32, #tpu.memory_space<vmem>>, vector<1x1x8x32xf32>
    %58 = vector.shape_cast %57 : vector<1x1x8x32xf32> to vector<8x32xf32>
    %59 = arith.mulf %58, %56 : vector<8x32xf32>
    %cst_66 = arith.constant dense<0.000000e+00> : vector<32xf32>
    %60 = vector.multi_reduction <add>, %59, %cst_66 [0] : vector<8x32xf32> to vector<32xf32>
    %61 = vector.shape_cast %60 : vector<32xf32> to vector<1x32xf32>
    %c6_67 = arith.constant 6 : index
    %c0_68 = arith.constant 0 : index
    %62 = vector.load %arg5[%c6_67, %c0_68] : memref<8x32xf32, #tpu.memory_space<vmem>>, vector<1x32xf32>
    tpu.vector_store %arg5[%c6_67, %c0_68], %61 {strides = array<i32>} : memref<8x32xf32, #tpu.memory_space<vmem>>, vector<1x32xf32>,
    %c0_69 = arith.constant 0 : index
    %c7 = arith.constant 7 : index
    %c0_70 = arith.constant 0 : index
    %c0_71 = arith.constant 0 : index
    %63 = vector.load %arg3[%c0_69, %c7, %c0_70, %c0_71] : memref<1x8x8x4xf32, #tpu.memory_space<vmem>>, vector<1x1x8x4xf32>
    %64 = vector.shape_cast %63 : vector<1x1x8x4xf32> to vector<8x4xf32>
    %65 = tpu.concatenate %64, %64, %64, %64, %64, %64, %64, %64 in 1 : vector<8x4xf32>, vector<8x4xf32>, vector<8x4xf32>, vector<8x4xf32>, vector<8x4xf32>, vector<8x4xf32>, vector<8x4xf32>, vector<8x4xf32> -> vector<8x32xf32>
    %c0_72 = arith.constant 0 : index
    %c7_73 = arith.constant 7 : index
    %c0_74 = arith.constant 0 : index
    %c0_75 = arith.constant 0 : index
    %66 = vector.load %arg1[%c0_72, %c7_73, %c0_74, %c0_75] : memref<1x8x8x32xf32, #tpu.memory_space<vmem>>, vector<1x1x8x32xf32>
    %67 = vector.shape_cast %66 : vector<1x1x8x32xf32> to vector<8x32xf32>
    %68 = arith.mulf %67, %65 : vector<8x32xf32>
    %cst_76 = arith.constant dense<0.000000e+00> : vector<32xf32>
    %69 = vector.multi_reduction <add>, %68, %cst_76 [0] : vector<8x32xf32> to vector<32xf32>
    %70 = vector.shape_cast %69 : vector<32xf32> to vector<1x32xf32>
    %c7_77 = arith.constant 7 : index
    %c0_78 = arith.constant 0 : index
    %71 = vector.load %arg5[%c7_77, %c0_78] : memref<8x32xf32, #tpu.memory_space<vmem>>, vector<1x32xf32>
    tpu.vector_store %arg5[%c7_77, %c0_78], %70 {strides = array<i32>} : memref<8x32xf32, #tpu.memory_space<vmem>>, vector<1x32xf32>,
    %c0_79 = arith.constant 0 : index
    %c0_80 = arith.constant 0 : index
    %72 = vector.load %arg5[%c0_79, %c0_80] : memref<8x32xf32, #tpu.memory_space<vmem>>, vector<1x32xf32>
    %c0_81 = arith.constant 0 : index
    %c0_82 = arith.constant 0 : index
    %c0_83 = arith.constant 0 : index
    %73 = vector.load %arg4[%c0_81, %c0_82, %c0_83] : memref<1x8x32xf32, #tpu.memory_space<vmem>>, vector<1x1x32xf32>
    %74 = vector.shape_cast %73 : vector<1x1x32xf32> to vector<1x32xf32>
    %75 = vector.shape_cast %72 : vector<1x32xf32> to vector<1x1x32xf32>
    tpu.vector_store %arg4[%c0_81, %c0_82, %c0_83], %75 {strides = array<i32>} : memref<1x8x32xf32, #tpu.memory_space<vmem>>, vector<1x1x32xf32>,
    %76 = vector.extract_strided_slice %72 {offsets = [0, 0], sizes = [1, 4], strides = [1, 1]} : vector<1x32xf32> to vector<1x4xf32>
    %77 = vector.extract_strided_slice %72 {offsets = [0, 4], sizes = [1, 4], strides = [1, 1]} : vector<1x32xf32> to vector<1x4xf32>
    %78 = vector.extract_strided_slice %72 {offsets = [0, 8], sizes = [1, 4], strides = [1, 1]} : vector<1x32xf32> to vector<1x4xf32>
    %79 = vector.extract_strided_slice %72 {offsets = [0, 12], sizes = [1, 4], strides = [1, 1]} : vector<1x32xf32> to vector<1x4xf32>
    %80 = vector.extract_strided_slice %72 {offsets = [0, 16], sizes = [1, 4], strides = [1, 1]} : vector<1x32xf32> to vector<1x4xf32>
    %81 = vector.extract_strided_slice %72 {offsets = [0, 20], sizes = [1, 4], strides = [1, 1]} : vector<1x32xf32> to vector<1x4xf32>
    %82 = vector.extract_strided_slice %72 {offsets = [0, 24], sizes = [1, 4], strides = [1, 1]} : vector<1x32xf32> to vector<1x4xf32>
    %83 = vector.extract_strided_slice %72 {offsets = [0, 28], sizes = [1, 4], strides = [1, 1]} : vector<1x32xf32> to vector<1x4xf32>
    %84 = tpu.concatenate %76, %77, %78, %79, %80, %81, %82, %83 in 0 : vector<1x4xf32>, vector<1x4xf32>, vector<1x4xf32>, vector<1x4xf32>, vector<1x4xf32>, vector<1x4xf32>, vector<1x4xf32>, vector<1x4xf32> -> vector<8x4xf32>
    %85 = tpu.concatenate %84, %84, %84, %84, %84, %84, %84, %84 in 1 : vector<8x4xf32>, vector<8x4xf32>, vector<8x4xf32>, vector<8x4xf32>, vector<8x4xf32>, vector<8x4xf32>, vector<8x4xf32>, vector<8x4xf32> -> vector<8x32xf32>
    %c1_84 = arith.constant 1 : index
    %c0_85 = arith.constant 0 : index
    %86 = vector.load %arg5[%c1_84, %c0_85] : memref<8x32xf32, #tpu.memory_space<vmem>>, vector<1x32xf32>
    %c0_86 = arith.constant 0 : index
    %c1_87 = arith.constant 1 : index
    %c0_88 = arith.constant 0 : index
    %c0_89 = arith.constant 0 : index
    %87 = vector.load %arg2[%c0_86, %c1_87, %c0_88, %c0_89] : memref<1x8x8x32xf32, #tpu.memory_space<vmem>>, vector<1x1x8x32xf32>
    %88 = vector.shape_cast %87 : vector<1x1x8x32xf32> to vector<8x32xf32>
    %89 = arith.mulf %88, %85 : vector<8x32xf32>
    %cst_90 = arith.constant dense<0.000000e+00> : vector<32xf32>
    %90 = vector.multi_reduction <add>, %89, %cst_90 [0] : vector<8x32xf32> to vector<32xf32>
    %91 = vector.shape_cast %90 : vector<32xf32> to vector<1x32xf32>
    %92 = arith.subf %86, %91 : vector<1x32xf32>
    %c0_91 = arith.constant 0 : index
    %c1_92 = arith.constant 1 : index
    %c0_93 = arith.constant 0 : index
    %93 = vector.load %arg4[%c0_91, %c1_92, %c0_93] : memref<1x8x32xf32, #tpu.memory_space<vmem>>, vector<1x1x32xf32>
    %94 = vector.shape_cast %93 : vector<1x1x32xf32> to vector<1x32xf32>
    %95 = vector.shape_cast %92 : vector<1x32xf32> to vector<1x1x32xf32>
    tpu.vector_store %arg4[%c0_91, %c1_92, %c0_93], %95 {strides = array<i32>} : memref<1x8x32xf32, #tpu.memory_space<vmem>>, vector<1x1x32xf32>,
    %96 = vector.extract_strided_slice %92 {offsets = [0, 0], sizes = [1, 4], strides = [1, 1]} : vector<1x32xf32> to vector<1x4xf32>
    %97 = vector.extract_strided_slice %92 {offsets = [0, 4], sizes = [1, 4], strides = [1, 1]} : vector<1x32xf32> to vector<1x4xf32>
    %98 = vector.extract_strided_slice %92 {offsets = [0, 8], sizes = [1, 4], strides = [1, 1]} : vector<1x32xf32> to vector<1x4xf32>
    %99 = vector.extract_strided_slice %92 {offsets = [0, 12], sizes = [1, 4], strides = [1, 1]} : vector<1x32xf32> to vector<1x4xf32>
    %100 = vector.extract_strided_slice %92 {offsets = [0, 16], sizes = [1, 4], strides = [1, 1]} : vector<1x32xf32> to vector<1x4xf32>
    %101 = vector.extract_strided_slice %92 {offsets = [0, 20], sizes = [1, 4], strides = [1, 1]} : vector<1x32xf32> to vector<1x4xf32>
    %102 = vector.extract_strided_slice %92 {offsets = [0, 24], sizes = [1, 4], strides = [1, 1]} : vector<1x32xf32> to vector<1x4xf32>
    %103 = vector.extract_strided_slice %92 {offsets = [0, 28], sizes = [1, 4], strides = [1, 1]} : vector<1x32xf32> to vector<1x4xf32>
    %104 = tpu.concatenate %96, %97, %98, %99, %100, %101, %102, %103 in 0 : vector<1x4xf32>, vector<1x4xf32>, vector<1x4xf32>, vector<1x4xf32>, vector<1x4xf32>, vector<1x4xf32>, vector<1x4xf32>, vector<1x4xf32> -> vector<8x4xf32>
    %105 = tpu.concatenate %104, %104, %104, %104, %104, %104, %104, %104 in 1 : vector<8x4xf32>, vector<8x4xf32>, vector<8x4xf32>, vector<8x4xf32>, vector<8x4xf32>, vector<8x4xf32>, vector<8x4xf32>, vector<8x4xf32> -> vector<8x32xf32>
    %c2_94 = arith.constant 2 : index
    %c0_95 = arith.constant 0 : index
    %106 = vector.load %arg5[%c2_94, %c0_95] : memref<8x32xf32, #tpu.memory_space<vmem>>, vector<1x32xf32>
    %c0_96 = arith.constant 0 : index
    %c2_97 = arith.constant 2 : index
    %c0_98 = arith.constant 0 : index
    %c0_99 = arith.constant 0 : index
    %107 = vector.load %arg2[%c0_96, %c2_97, %c0_98, %c0_99] : memref<1x8x8x32xf32, #tpu.memory_space<vmem>>, vector<1x1x8x32xf32>
    %108 = vector.shape_cast %107 : vector<1x1x8x32xf32> to vector<8x32xf32>
    %109 = arith.mulf %108, %105 : vector<8x32xf32>
    %cst_100 = arith.constant dense<0.000000e+00> : vector<32xf32>
    %110 = vector.multi_reduction <add>, %109, %cst_100 [0] : vector<8x32xf32> to vector<32xf32>
    %111 = vector.shape_cast %110 : vector<32xf32> to vector<1x32xf32>
    %112 = arith.subf %106, %111 : vector<1x32xf32>
    %c0_101 = arith.constant 0 : index
    %c2_102 = arith.constant 2 : index
    %c0_103 = arith.constant 0 : index
    %113 = vector.load %arg4[%c0_101, %c2_102, %c0_103] : memref<1x8x32xf32, #tpu.memory_space<vmem>>, vector<1x1x32xf32>
    %114 = vector.shape_cast %113 : vector<1x1x32xf32> to vector<1x32xf32>
    %115 = vector.shape_cast %112 : vector<1x32xf32> to vector<1x1x32xf32>
    tpu.vector_store %arg4[%c0_101, %c2_102, %c0_103], %115 {strides = array<i32>} : memref<1x8x32xf32, #tpu.memory_space<vmem>>, vector<1x1x32xf32>,
    %116 = vector.extract_strided_slice %112 {offsets = [0, 0], sizes = [1, 4], strides = [1, 1]} : vector<1x32xf32> to vector<1x4xf32>
    %117 = vector.extract_strided_slice %112 {offsets = [0, 4], sizes = [1, 4], strides = [1, 1]} : vector<1x32xf32> to vector<1x4xf32>
    %118 = vector.extract_strided_slice %112 {offsets = [0, 8], sizes = [1, 4], strides = [1, 1]} : vector<1x32xf32> to vector<1x4xf32>
    %119 = vector.extract_strided_slice %112 {offsets = [0, 12], sizes = [1, 4], strides = [1, 1]} : vector<1x32xf32> to vector<1x4xf32>
    %120 = vector.extract_strided_slice %112 {offsets = [0, 16], sizes = [1, 4], strides = [1, 1]} : vector<1x32xf32> to vector<1x4xf32>
    %121 = vector.extract_strided_slice %112 {offsets = [0, 20], sizes = [1, 4], strides = [1, 1]} : vector<1x32xf32> to vector<1x4xf32>
    %122 = vector.extract_strided_slice %112 {offsets = [0, 24], sizes = [1, 4], strides = [1, 1]} : vector<1x32xf32> to vector<1x4xf32>
    %123 = vector.extract_strided_slice %112 {offsets = [0, 28], sizes = [1, 4], strides = [1, 1]} : vector<1x32xf32> to vector<1x4xf32>
    %124 = tpu.concatenate %116, %117, %118, %119, %120, %121, %122, %123 in 0 : vector<1x4xf32>, vector<1x4xf32>, vector<1x4xf32>, vector<1x4xf32>, vector<1x4xf32>, vector<1x4xf32>, vector<1x4xf32>, vector<1x4xf32> -> vector<8x4xf32>
    %125 = tpu.concatenate %124, %124, %124, %124, %124, %124, %124, %124 in 1 : vector<8x4xf32>, vector<8x4xf32>, vector<8x4xf32>, vector<8x4xf32>, vector<8x4xf32>, vector<8x4xf32>, vector<8x4xf32>, vector<8x4xf32> -> vector<8x32xf32>
    %c3_104 = arith.constant 3 : index
    %c0_105 = arith.constant 0 : index
    %126 = vector.load %arg5[%c3_104, %c0_105] : memref<8x32xf32, #tpu.memory_space<vmem>>, vector<1x32xf32>
    %c0_106 = arith.constant 0 : index
    %c3_107 = arith.constant 3 : index
    %c0_108 = arith.constant 0 : index
    %c0_109 = arith.constant 0 : index
    %127 = vector.load %arg2[%c0_106, %c3_107, %c0_108, %c0_109] : memref<1x8x8x32xf32, #tpu.memory_space<vmem>>, vector<1x1x8x32xf32>
    %128 = vector.shape_cast %127 : vector<1x1x8x32xf32> to vector<8x32xf32>
    %129 = arith.mulf %128, %125 : vector<8x32xf32>
    %cst_110 = arith.constant dense<0.000000e+00> : vector<32xf32>
    %130 = vector.multi_reduction <add>, %129, %cst_110 [0] : vector<8x32xf32> to vector<32xf32>
    %131 = vector.shape_cast %130 : vector<32xf32> to vector<1x32xf32>
    %132 = arith.subf %126, %131 : vector<1x32xf32>
    %c0_111 = arith.constant 0 : index
    %c3_112 = arith.constant 3 : index
    %c0_113 = arith.constant 0 : index
    %133 = vector.load %arg4[%c0_111, %c3_112, %c0_113] : memref<1x8x32xf32, #tpu.memory_space<vmem>>, vector<1x1x32xf32>
    %134 = vector.shape_cast %133 : vector<1x1x32xf32> to vector<1x32xf32>
    %135 = vector.shape_cast %132 : vector<1x32xf32> to vector<1x1x32xf32>
    tpu.vector_store %arg4[%c0_111, %c3_112, %c0_113], %135 {strides = array<i32>} : memref<1x8x32xf32, #tpu.memory_space<vmem>>, vector<1x1x32xf32>,
    %136 = vector.extract_strided_slice %132 {offsets = [0, 0], sizes = [1, 4], strides = [1, 1]} : vector<1x32xf32> to vector<1x4xf32>
    %137 = vector.extract_strided_slice %132 {offsets = [0, 4], sizes = [1, 4], strides = [1, 1]} : vector<1x32xf32> to vector<1x4xf32>
    %138 = vector.extract_strided_slice %132 {offsets = [0, 8], sizes = [1, 4], strides = [1, 1]} : vector<1x32xf32> to vector<1x4xf32>
    %139 = vector.extract_strided_slice %132 {offsets = [0, 12], sizes = [1, 4], strides = [1, 1]} : vector<1x32xf32> to vector<1x4xf32>
    %140 = vector.extract_strided_slice %132 {offsets = [0, 16], sizes = [1, 4], strides = [1, 1]} : vector<1x32xf32> to vector<1x4xf32>
    %141 = vector.extract_strided_slice %132 {offsets = [0, 20], sizes = [1, 4], strides = [1, 1]} : vector<1x32xf32> to vector<1x4xf32>
    %142 = vector.extract_strided_slice %132 {offsets = [0, 24], sizes = [1, 4], strides = [1, 1]} : vector<1x32xf32> to vector<1x4xf32>
    %143 = vector.extract_strided_slice %132 {offsets = [0, 28], sizes = [1, 4], strides = [1, 1]} : vector<1x32xf32> to vector<1x4xf32>
    %144 = tpu.concatenate %136, %137, %138, %139, %140, %141, %142, %143 in 0 : vector<1x4xf32>, vector<1x4xf32>, vector<1x4xf32>, vector<1x4xf32>, vector<1x4xf32>, vector<1x4xf32>, vector<1x4xf32>, vector<1x4xf32> -> vector<8x4xf32>
    %145 = tpu.concatenate %144, %144, %144, %144, %144, %144, %144, %144 in 1 : vector<8x4xf32>, vector<8x4xf32>, vector<8x4xf32>, vector<8x4xf32>, vector<8x4xf32>, vector<8x4xf32>, vector<8x4xf32>, vector<8x4xf32> -> vector<8x32xf32>
    %c4_114 = arith.constant 4 : index
    %c0_115 = arith.constant 0 : index
    %146 = vector.load %arg5[%c4_114, %c0_115] : memref<8x32xf32, #tpu.memory_space<vmem>>, vector<1x32xf32>
    %c0_116 = arith.constant 0 : index
    %c4_117 = arith.constant 4 : index
    %c0_118 = arith.constant 0 : index
    %c0_119 = arith.constant 0 : index
    %147 = vector.load %arg2[%c0_116, %c4_117, %c0_118, %c0_119] : memref<1x8x8x32xf32, #tpu.memory_space<vmem>>, vector<1x1x8x32xf32>
    %148 = vector.shape_cast %147 : vector<1x1x8x32xf32> to vector<8x32xf32>
    %149 = arith.mulf %148, %145 : vector<8x32xf32>
    %cst_120 = arith.constant dense<0.000000e+00> : vector<32xf32>
    %150 = vector.multi_reduction <add>, %149, %cst_120 [0] : vector<8x32xf32> to vector<32xf32>
    %151 = vector.shape_cast %150 : vector<32xf32> to vector<1x32xf32>
    %152 = arith.subf %146, %151 : vector<1x32xf32>
    %c0_121 = arith.constant 0 : index
    %c4_122 = arith.constant 4 : index
    %c0_123 = arith.constant 0 : index
    %153 = vector.load %arg4[%c0_121, %c4_122, %c0_123] : memref<1x8x32xf32, #tpu.memory_space<vmem>>, vector<1x1x32xf32>
    %154 = vector.shape_cast %153 : vector<1x1x32xf32> to vector<1x32xf32>
    %155 = vector.shape_cast %152 : vector<1x32xf32> to vector<1x1x32xf32>
    tpu.vector_store %arg4[%c0_121, %c4_122, %c0_123], %155 {strides = array<i32>} : memref<1x8x32xf32, #tpu.memory_space<vmem>>, vector<1x1x32xf32>,
    %156 = vector.extract_strided_slice %152 {offsets = [0, 0], sizes = [1, 4], strides = [1, 1]} : vector<1x32xf32> to vector<1x4xf32>
    %157 = vector.extract_strided_slice %152 {offsets = [0, 4], sizes = [1, 4], strides = [1, 1]} : vector<1x32xf32> to vector<1x4xf32>
    %158 = vector.extract_strided_slice %152 {offsets = [0, 8], sizes = [1, 4], strides = [1, 1]} : vector<1x32xf32> to vector<1x4xf32>
    %159 = vector.extract_strided_slice %152 {offsets = [0, 12], sizes = [1, 4], strides = [1, 1]} : vector<1x32xf32> to vector<1x4xf32>
    %160 = vector.extract_strided_slice %152 {offsets = [0, 16], sizes = [1, 4], strides = [1, 1]} : vector<1x32xf32> to vector<1x4xf32>
    %161 = vector.extract_strided_slice %152 {offsets = [0, 20], sizes = [1, 4], strides = [1, 1]} : vector<1x32xf32> to vector<1x4xf32>
    %162 = vector.extract_strided_slice %152 {offsets = [0, 24], sizes = [1, 4], strides = [1, 1]} : vector<1x32xf32> to vector<1x4xf32>
    %163 = vector.extract_strided_slice %152 {offsets = [0, 28], sizes = [1, 4], strides = [1, 1]} : vector<1x32xf32> to vector<1x4xf32>
    %164 = tpu.concatenate %156, %157, %158, %159, %160, %161, %162, %163 in 0 : vector<1x4xf32>, vector<1x4xf32>, vector<1x4xf32>, vector<1x4xf32>, vector<1x4xf32>, vector<1x4xf32>, vector<1x4xf32>, vector<1x4xf32> -> vector<8x4xf32>
    %165 = tpu.concatenate %164, %164, %164, %164, %164, %164, %164, %164 in 1 : vector<8x4xf32>, vector<8x4xf32>, vector<8x4xf32>, vector<8x4xf32>, vector<8x4xf32>, vector<8x4xf32>, vector<8x4xf32>, vector<8x4xf32> -> vector<8x32xf32>
    %c5_124 = arith.constant 5 : index
    %c0_125 = arith.constant 0 : index
    %166 = vector.load %arg5[%c5_124, %c0_125] : memref<8x32xf32, #tpu.memory_space<vmem>>, vector<1x32xf32>
    %c0_126 = arith.constant 0 : index
    %c5_127 = arith.constant 5 : index
    %c0_128 = arith.constant 0 : index
    %c0_129 = arith.constant 0 : index
    %167 = vector.load %arg2[%c0_126, %c5_127, %c0_128, %c0_129] : memref<1x8x8x32xf32, #tpu.memory_space<vmem>>, vector<1x1x8x32xf32>
    %168 = vector.shape_cast %167 : vector<1x1x8x32xf32> to vector<8x32xf32>
    %169 = arith.mulf %168, %165 : vector<8x32xf32>
    %cst_130 = arith.constant dense<0.000000e+00> : vector<32xf32>
    %170 = vector.multi_reduction <add>, %169, %cst_130 [0] : vector<8x32xf32> to vector<32xf32>
    %171 = vector.shape_cast %170 : vector<32xf32> to vector<1x32xf32>
    %172 = arith.subf %166, %171 : vector<1x32xf32>
    %c0_131 = arith.constant 0 : index
    %c5_132 = arith.constant 5 : index
    %c0_133 = arith.constant 0 : index
    %173 = vector.load %arg4[%c0_131, %c5_132, %c0_133] : memref<1x8x32xf32, #tpu.memory_space<vmem>>, vector<1x1x32xf32>
    %174 = vector.shape_cast %173 : vector<1x1x32xf32> to vector<1x32xf32>
    %175 = vector.shape_cast %172 : vector<1x32xf32> to vector<1x1x32xf32>
    tpu.vector_store %arg4[%c0_131, %c5_132, %c0_133], %175 {strides = array<i32>} : memref<1x8x32xf32, #tpu.memory_space<vmem>>, vector<1x1x32xf32>,
    %176 = vector.extract_strided_slice %172 {offsets = [0, 0], sizes = [1, 4], strides = [1, 1]} : vector<1x32xf32> to vector<1x4xf32>
    %177 = vector.extract_strided_slice %172 {offsets = [0, 4], sizes = [1, 4], strides = [1, 1]} : vector<1x32xf32> to vector<1x4xf32>
    %178 = vector.extract_strided_slice %172 {offsets = [0, 8], sizes = [1, 4], strides = [1, 1]} : vector<1x32xf32> to vector<1x4xf32>
    %179 = vector.extract_strided_slice %172 {offsets = [0, 12], sizes = [1, 4], strides = [1, 1]} : vector<1x32xf32> to vector<1x4xf32>
    %180 = vector.extract_strided_slice %172 {offsets = [0, 16], sizes = [1, 4], strides = [1, 1]} : vector<1x32xf32> to vector<1x4xf32>
    %181 = vector.extract_strided_slice %172 {offsets = [0, 20], sizes = [1, 4], strides = [1, 1]} : vector<1x32xf32> to vector<1x4xf32>
    %182 = vector.extract_strided_slice %172 {offsets = [0, 24], sizes = [1, 4], strides = [1, 1]} : vector<1x32xf32> to vector<1x4xf32>
    %183 = vector.extract_strided_slice %172 {offsets = [0, 28], sizes = [1, 4], strides = [1, 1]} : vector<1x32xf32> to vector<1x4xf32>
    %184 = tpu.concatenate %176, %177, %178, %179, %180, %181, %182, %183 in 0 : vector<1x4xf32>, vector<1x4xf32>, vector<1x4xf32>, vector<1x4xf32>, vector<1x4xf32>, vector<1x4xf32>, vector<1x4xf32>, vector<1x4xf32> -> vector<8x4xf32>
    %185 = tpu.concatenate %184, %184, %184, %184, %184, %184, %184, %184 in 1 : vector<8x4xf32>, vector<8x4xf32>, vector<8x4xf32>, vector<8x4xf32>, vector<8x4xf32>, vector<8x4xf32>, vector<8x4xf32>, vector<8x4xf32> -> vector<8x32xf32>
    %c6_134 = arith.constant 6 : index
    %c0_135 = arith.constant 0 : index
    %186 = vector.load %arg5[%c6_134, %c0_135] : memref<8x32xf32, #tpu.memory_space<vmem>>, vector<1x32xf32>
    %c0_136 = arith.constant 0 : index
    %c6_137 = arith.constant 6 : index
    %c0_138 = arith.constant 0 : index
    %c0_139 = arith.constant 0 : index
    %187 = vector.load %arg2[%c0_136, %c6_137, %c0_138, %c0_139] : memref<1x8x8x32xf32, #tpu.memory_space<vmem>>, vector<1x1x8x32xf32>
    %188 = vector.shape_cast %187 : vector<1x1x8x32xf32> to vector<8x32xf32>
    %189 = arith.mulf %188, %185 : vector<8x32xf32>
    %cst_140 = arith.constant dense<0.000000e+00> : vector<32xf32>
    %190 = vector.multi_reduction <add>, %189, %cst_140 [0] : vector<8x32xf32> to vector<32xf32>
    %191 = vector.shape_cast %190 : vector<32xf32> to vector<1x32xf32>
    %192 = arith.subf %186, %191 : vector<1x32xf32>
    %c0_141 = arith.constant 0 : index
    %c6_142 = arith.constant 6 : index
    %c0_143 = arith.constant 0 : index
    %193 = vector.load %arg4[%c0_141, %c6_142, %c0_143] : memref<1x8x32xf32, #tpu.memory_space<vmem>>, vector<1x1x32xf32>
    %194 = vector.shape_cast %193 : vector<1x1x32xf32> to vector<1x32xf32>
    %195 = vector.shape_cast %192 : vector<1x32xf32> to vector<1x1x32xf32>
    tpu.vector_store %arg4[%c0_141, %c6_142, %c0_143], %195 {strides = array<i32>} : memref<1x8x32xf32, #tpu.memory_space<vmem>>, vector<1x1x32xf32>,
    %196 = vector.extract_strided_slice %192 {offsets = [0, 0], sizes = [1, 4], strides = [1, 1]} : vector<1x32xf32> to vector<1x4xf32>
    %197 = vector.extract_strided_slice %192 {offsets = [0, 4], sizes = [1, 4], strides = [1, 1]} : vector<1x32xf32> to vector<1x4xf32>
    %198 = vector.extract_strided_slice %192 {offsets = [0, 8], sizes = [1, 4], strides = [1, 1]} : vector<1x32xf32> to vector<1x4xf32>
    %199 = vector.extract_strided_slice %192 {offsets = [0, 12], sizes = [1, 4], strides = [1, 1]} : vector<1x32xf32> to vector<1x4xf32>
    %200 = vector.extract_strided_slice %192 {offsets = [0, 16], sizes = [1, 4], strides = [1, 1]} : vector<1x32xf32> to vector<1x4xf32>
    %201 = vector.extract_strided_slice %192 {offsets = [0, 20], sizes = [1, 4], strides = [1, 1]} : vector<1x32xf32> to vector<1x4xf32>
    %202 = vector.extract_strided_slice %192 {offsets = [0, 24], sizes = [1, 4], strides = [1, 1]} : vector<1x32xf32> to vector<1x4xf32>
    %203 = vector.extract_strided_slice %192 {offsets = [0, 28], sizes = [1, 4], strides = [1, 1]} : vector<1x32xf32> to vector<1x4xf32>
    %204 = tpu.concatenate %196, %197, %198, %199, %200, %201, %202, %203 in 0 : vector<1x4xf32>, vector<1x4xf32>, vector<1x4xf32>, vector<1x4xf32>, vector<1x4xf32>, vector<1x4xf32>, vector<1x4xf32>, vector<1x4xf32> -> vector<8x4xf32>
    %205 = tpu.concatenate %204, %204, %204, %204, %204, %204, %204, %204 in 1 : vector<8x4xf32>, vector<8x4xf32>, vector<8x4xf32>, vector<8x4xf32>, vector<8x4xf32>, vector<8x4xf32>, vector<8x4xf32>, vector<8x4xf32> -> vector<8x32xf32>
    %c7_144 = arith.constant 7 : index
    %c0_145 = arith.constant 0 : index
    %206 = vector.load %arg5[%c7_144, %c0_145] : memref<8x32xf32, #tpu.memory_space<vmem>>, vector<1x32xf32>
    %c0_146 = arith.constant 0 : index
    %c7_147 = arith.constant 7 : index
    %c0_148 = arith.constant 0 : index
    %c0_149 = arith.constant 0 : index
    %207 = vector.load %arg2[%c0_146, %c7_147, %c0_148, %c0_149] : memref<1x8x8x32xf32, #tpu.memory_space<vmem>>, vector<1x1x8x32xf32>
    %208 = vector.shape_cast %207 : vector<1x1x8x32xf32> to vector<8x32xf32>
    %209 = arith.mulf %208, %205 : vector<8x32xf32>
    %cst_150 = arith.constant dense<0.000000e+00> : vector<32xf32>
    %210 = vector.multi_reduction <add>, %209, %cst_150 [0] : vector<8x32xf32> to vector<32xf32>
    %211 = vector.shape_cast %210 : vector<32xf32> to vector<1x32xf32>
    %212 = arith.subf %206, %211 : vector<1x32xf32>
    %c0_151 = arith.constant 0 : index
    %c7_152 = arith.constant 7 : index
    %c0_153 = arith.constant 0 : index
    %213 = vector.load %arg4[%c0_151, %c7_152, %c0_153] : memref<1x8x32xf32, #tpu.memory_space<vmem>>, vector<1x1x32xf32>
    %214 = vector.shape_cast %213 : vector<1x1x32xf32> to vector<1x32xf32>
    %215 = vector.shape_cast %212 : vector<1x32xf32> to vector<1x1x32xf32>
    tpu.vector_store %arg4[%c0_151, %c7_152, %c0_153], %215 {strides = array<i32>} : memref<1x8x32xf32, #tpu.memory_space<vmem>>, vector<1x1x32xf32>,
    return
  }
  func.func @transform_0(%arg0: i32) -> (i32, i32, i32, i32) {
    %c0_i32 = arith.constant 0 : i32
    %c0_i32_0 = arith.constant 0 : i32
    %c0_i32_1 = arith.constant 0 : i32
    %c0_i32_2 = arith.constant 0 : i32
    return %arg0, %c0_i32, %c0_i32_0, %c0_i32_1 : i32, i32, i32, i32
  }
  func.func @transform_1(%arg0: i32) -> (i32, i32, i32, i32) {
    %c0_i32 = arith.constant 0 : i32
    %c0_i32_0 = arith.constant 0 : i32
    %c0_i32_1 = arith.constant 0 : i32
    %c0_i32_2 = arith.constant 0 : i32
    return %arg0, %c0_i32, %c0_i32_0, %c0_i32_1 : i32, i32, i32, i32
  }
  func.func @transform_2(%arg0: i32) -> (i32, i32, i32, i32) {
    %c0_i32 = arith.constant 0 : i32
    %c0_i32_0 = arith.constant 0 : i32
    %c0_i32_1 = arith.constant 0 : i32
    %c0_i32_2 = arith.constant 0 : i32
    return %arg0, %c0_i32, %c0_i32_0, %c0_i32_1 : i32, i32, i32, i32
  }
  func.func @transform_3(%arg0: i32) -> (i32, i32, i32) {
    %c0_i32 = arith.constant 0 : i32
    %c0_i32_0 = arith.constant 0 : i32
    %c0_i32_1 = arith.constant 0 : i32
    return %arg0, %c0_i32, %c0_i32_0 : i32, i32, i32
  }
}

</mosaic_0001>

<llo_original>
// kernel: tpu_custom_call.1
$region0: #{tpu_custom_call.1}
  #allocation0 [shape = 'u32[]', space=smem, size = 0x4, offset = 0x4, fixed_abs, tag = 'smem constant byte address 0x4 - core index']
  #allocation1 [shape = 'u32[144,128]{1,0:T(1,128)}', space=vmem, size = 0x12000, scoped, tag = 'internal scratch']
  #allocation2 [shape = 'f32[8,32]{1,0:T(8,128)}', space=vmem, size = 0x1000, scoped, tag = 'scratch operand']
  %s0 = inlined_call_operand.vmem [shape: f32[1,8,8,32], index: 0, kind: input, shape index: {}]
  %s1 = inlined_call_operand.hbm [shape: f32[1,8,8,32], index: 1, kind: input, shape index: {}]
  %s2 = inlined_call_operand.vmem [shape: f32[1,8,8,4], index: 2, kind: input, shape index: {}]
  %s3 = inlined_call_operand.hbm [shape: f32[1,8,32], index: 3, kind: output, shape index: {}]
  %s4 = sld [smem:[#allocation0]]
  $region26: #{tpu_custom_call.1} parent=0
    _
  %s6 = ssub.s32 1, %s4
  %s7 = scalar_select 0, %s6, %s4
  $region1: #{tpu_custom_call.1} parent=0
    #allocation3 [shape = 'u8[32768]{0}', space=vmem, size = 0x8000, scoped, tag = 'input window, operand 1, single buffered']
    #allocation4 [shape = 's32[1]{0}', space=sflag, size = 0x4, scoped, tag = 'scoped memory for tpu_custom_call.1']
    #allocation5 [shape = 's32[1]{0}', space=sflag, size = 0x4, scoped, tag = 'scoped memory for tpu_custom_call.1']
    #allocation6 [shape = 'u8[4096]{0}', space=vmem, size = 0x1000, scoped, tag = 'output window, operand 0, single buffered']
    %8 = vsyncpa [#allocation4], 0
    %9 = vsyncpa [#allocation5], 0
    // Predicated region
    $region2: #{tpu_custom_call.1} parent=1 // pred_check
      _
    $region3: #{tpu_custom_call.1} parent=1 // pred_check_branch
      %11 = sbr.rel (0) target = $region5
    $region4: #{tpu_custom_call.1} parent=1 // pred_region
      _
    $region5: #{tpu_custom_call.1} parent=1 // pred_fallthru
      _
    // Predicated region
    $region6: #{tpu_custom_call.1} parent=1 // pred_check
      _
    $region7: #{tpu_custom_call.1} parent=1 // pred_check_branch
      %13 = sbr.rel (0) target = $region9
    $region8: #{tpu_custom_call.1} parent=1 // pred_region
      %s15 = ssub.s32 1024, 1024
      %16 = vsyncadd [#allocation4], %s15
      %s17 = sshll.u32 [#allocation3], 4
      %s18 = int_to_ptr.vmem [resolvable:$true] %s17
      %23 = dma.hbm_to_vmem [thread:$0]  %s1, 1024, %s18, [#allocation4], 128, 128, 8
    $region9: #{tpu_custom_call.1} parent=1 // pred_fallthru
      _
    // Predicated region
    $region10: #{tpu_custom_call.1} parent=1 // pred_check
      _
    $region11: #{tpu_custom_call.1} parent=1 // pred_check_branch
      %25 = sbr.rel (0) target = $region13
    $region12: #{tpu_custom_call.1} parent=1 // pred_region
      _
    $region13: #{tpu_custom_call.1} parent=1 // pred_fallthru
      _
    // Predicated region
    $region14: #{tpu_custom_call.1} parent=1 // pred_check
      _
    $region15: #{tpu_custom_call.1} parent=1 // pred_check_branch
      %27 = sbr.rel (0) target = $region17
    $region16: #{tpu_custom_call.1} parent=1 // pred_region
      %28 = dma.done [#allocation4], 1024
    $region17: #{tpu_custom_call.1} parent=1 // pred_fallthru
      _
    %v29 = vld [vmem:[%s2] sm:$0xff]
    %31 = vrot.lane.b32.xlu0 %v29, 4
    %v32 = vpop.permute.xlu0 %31
    %34 = vrot.lane.b32.xlu0 %v29, 8
    %v35 = vpop.permute.xlu0 %34
    %37 = vrot.lane.b32.xlu0 %v29, 12
    %v38 = vpop.permute.xlu0 %37
    %40 = vrot.lane.b32.xlu0 %v29, 16
    %v41 = vpop.permute.xlu0 %40
    %43 = vrot.lane.b32.xlu0 %v29, 20
    %v44 = vpop.permute.xlu0 %43
    %46 = vrot.lane.b32.xlu0 %v29, 24
    %v47 = vpop.permute.xlu0 %46
    %49 = vrot.lane.b32.xlu0 %v29, 28
    %v50 = vpop.permute.xlu0 %49
    %vm52 = vcmask 31744
    %v53 = vsel %vm52, %v29, %v32
    %vm54 = vcmask 64512
    %v55 = vsel %vm54, %v53, %v35
    %vm56 = vcmask 97280
    %v57 = vsel %vm56, %v55, %v38
    %vm58 = vcmask 130048
    %v59 = vsel %vm58, %v57, %v41
    %vm60 = vcmask 162816
    %v61 = vsel %vm60, %v59, %v44
    %vm62 = vcmask 195584
    %v63 = vsel %vm62, %v61, %v47
    %vm64 = vcmask 228352
    %v65 = vsel %vm64, %v63, %v50
    %v66 = vld [vmem:[%s0] sm:$0xff]
    %v67 = vmul.f32 %v66, %v65
    %vm68 = vcmask 261120
    %v69 = vsel %vm68, %v67, 0.0
    %v70 = vrot.slane %v69, 4
    %v71 = vadd.f32 %v69, %v70
    %v72 = vrot.slane %v71, 2
    %v73 = vadd.f32 %v71, %v72
    %v74 = vrot.slane %v73, 1
    %v75 = vadd.f32 %v73, %v74
    %vm76 = vcmask 253952
    %77 = vst.msk [vmem:[#allocation2] sm:$0x1] %vm76, %v75
    %s78 = scalar_lea.vmem %s2, 8
    %v79 = vld [vmem:[%s78] sm:$0xff]
    %81 = vrot.lane.b32.xlu0 %v79, 4
    %v82 = vpop.permute.xlu0 %81
    %84 = vrot.lane.b32.xlu0 %v79, 8
    %v85 = vpop.permute.xlu0 %84
    %87 = vrot.lane.b32.xlu0 %v79, 12
    %v88 = vpop.permute.xlu0 %87
    %90 = vrot.lane.b32.xlu0 %v79, 16
    %v91 = vpop.permute.xlu0 %90
    %93 = vrot.lane.b32.xlu0 %v79, 20
    %v94 = vpop.permute.xlu0 %93
    %96 = vrot.lane.b32.xlu0 %v79, 24
    %v97 = vpop.permute.xlu0 %96
    %99 = vrot.lane.b32.xlu0 %v79, 28
    %v100 = vpop.permute.xlu0 %99
    %v102 = vsel %vm52, %v79, %v82
    %v103 = vsel %vm54, %v102, %v85
    %v104 = vsel %vm56, %v103, %v88
    %v105 = vsel %vm58, %v104, %v91
    %v106 = vsel %vm60, %v105, %v94
    %v107 = vsel %vm62, %v106, %v97
    %v108 = vsel %vm64, %v107, %v100
    %s109 = scalar_lea.vmem %s0, 8
    %v110 = vld [vmem:[%s109] sm:$0xff]
    %v111 = vmul.f32 %v110, %v108
    %v112 = vsel %vm68, %v111, 0.0
    %v113 = vrot.slane %v112, 4
    %v114 = vadd.f32 %v112, %v113
    %v115 = vrot.slane %v114, 2
    %v116 = vadd.f32 %v114, %v115
    %v117 = vrot.slane %v116, 1
    %v118 = vadd.f32 %v116, %v117
    %119 = vst.msk [vmem:[#allocation2 + $0x1] sm:$0x1] %vm76, %v118
    %s120 = scalar_lea.vmem %s2, 16
    %v121 = vld [vmem:[%s120] sm:$0xff]
    %123 = vrot.lane.b32.xlu0 %v121, 4
    %v124 = vpop.permute.xlu0 %123
    %126 = vrot.lane.b32.xlu0 %v121, 8
    %v127 = vpop.permute.xlu0 %126
    %129 = vrot.lane.b32.xlu0 %v121, 12
    %v130 = vpop.permute.xlu0 %129
    %132 = vrot.lane.b32.xlu0 %v121, 16
    %v133 = vpop.permute.xlu0 %132
    %135 = vrot.lane.b32.xlu0 %v121, 20
    %v136 = vpop.permute.xlu0 %135
    %138 = vrot.lane.b32.xlu0 %v121, 24
    %v139 = vpop.permute.xlu0 %138
    %141 = vrot.lane.b32.xlu0 %v121, 28
    %v142 = vpop.permute.xlu0 %141
    %v144 = vsel %vm52, %v121, %v124
    %v145 = vsel %vm54, %v144, %v127
    %v146 = vsel %vm56, %v145, %v130
    %v147 = vsel %vm58, %v146, %v133
    %v148 = vsel %vm60, %v147, %v136
    %v149 = vsel %vm62, %v148, %v139
    %v150 = vsel %vm64, %v149, %v142
    %s151 = scalar_lea.vmem %s0, 16
    %v152 = vld [vmem:[%s151] sm:$0xff]
    %v153 = vmul.f32 %v152, %v150
    %v154 = vsel %vm68, %v153, 0.0
    %v155 = vrot.slane %v154, 4
    %v156 = vadd.f32 %v154, %v155
    %v157 = vrot.slane %v156, 2
    %v158 = vadd.f32 %v156, %v157
    %v159 = vrot.slane %v158, 1
    %v160 = vadd.f32 %v158, %v159
    %161 = vst.msk [vmem:[#allocation2 + $0x2] sm:$0x1] %vm76, %v160
    %s162 = scalar_lea.vmem %s2, 24
    %v163 = vld [vmem:[%s162] sm:$0xff]
    %165 = vrot.lane.b32.xlu0 %v163, 4
    %v166 = vpop.permute.xlu0 %165
    %168 = vrot.lane.b32.xlu0 %v163, 8
    %v169 = vpop.permute.xlu0 %168
    %171 = vrot.lane.b32.xlu0 %v163, 12
    %v172 = vpop.permute.xlu0 %171
    %174 = vrot.lane.b32.xlu0 %v163, 16
    %v175 = vpop.permute.xlu0 %174
    %177 = vrot.lane.b32.xlu0 %v163, 20
    %v178 = vpop.permute.xlu0 %177
    %180 = vrot.lane.b32.xlu0 %v163, 24
    %v181 = vpop.permute.xlu0 %180
    %183 = vrot.lane.b32.xlu0 %v163, 28
    %v184 = vpop.permute.xlu0 %183
    %v186 = vsel %vm52, %v163, %v166
    %v187 = vsel %vm54, %v186, %v169
    %v188 = vsel %vm56, %v187, %v172
    %v189 = vsel %vm58, %v188, %v175
    %v190 = vsel %vm60, %v189, %v178
    %v191 = vsel %vm62, %v190, %v181
    %v192 = vsel %vm64, %v191, %v184
    %s193 = scalar_lea.vmem %s0, 24
    %v194 = vld [vmem:[%s193] sm:$0xff]
    %v195 = vmul.f32 %v194, %v192
    %v196 = vsel %vm68, %v195, 0.0
    %v197 = vrot.slane %v196, 4
    %v198 = vadd.f32 %v196, %v197
    %v199 = vrot.slane %v198, 2
    %v200 = vadd.f32 %v198, %v199
    %v201 = vrot.slane %v200, 1
    %v202 = vadd.f32 %v200, %v201
    %203 = vst.msk [vmem:[#allocation2 + $0x3] sm:$0x1] %vm76, %v202
    %s204 = scalar_lea.vmem %s2, 32
    %v205 = vld [vmem:[%s204] sm:$0xff]
    %207 = vrot.lane.b32.xlu0 %v205, 4
    %v208 = vpop.permute.xlu0 %207
    %210 = vrot.lane.b32.xlu0 %v205, 8
    %v211 = vpop.permute.xlu0 %210
    %213 = vrot.lane.b32.xlu0 %v205, 12
    %v214 = vpop.permute.xlu0 %213
    %216 = vrot.lane.b32.xlu0 %v205, 16
    %v217 = vpop.permute.xlu0 %216
    %219 = vrot.lane.b32.xlu0 %v205, 20
    %v220 = vpop.permute.xlu0 %219
    %222 = vrot.lane.b32.xlu0 %v205, 24
    %v223 = vpop.permute.xlu0 %222
    %225 = vrot.lane.b32.xlu0 %v205, 28
    %v226 = vpop.permute.xlu0 %225
    %v228 = vsel %vm52, %v205, %v208
    %v229 = vsel %vm54, %v228, %v211
    %v230 = vsel %vm56, %v229, %v214
    %v231 = vsel %vm58, %v230, %v217
    %v232 = vsel %vm60, %v231, %v220
    %v233 = vsel %vm62, %v232, %v223
    %v234 = vsel %vm64, %v233, %v226
    %s235 = scalar_lea.vmem %s0, 32
    %v236 = vld [vmem:[%s235] sm:$0xff]
    %v237 = vmul.f32 %v236, %v234
    %v238 = vsel %vm68, %v237, 0.0
    %v239 = vrot.slane %v238, 4
    %v240 = vadd.f32 %v238, %v239
    %v241 = vrot.slane %v240, 2
    %v242 = vadd.f32 %v240, %v241
    %v243 = vrot.slane %v242, 1
    %v244 = vadd.f32 %v242, %v243
    %245 = vst.msk [vmem:[#allocation2 + $0x4] sm:$0x1] %vm76, %v244
    %s246 = scalar_lea.vmem %s2, 40
    %v247 = vld [vmem:[%s246] sm:$0xff]
    %249 = vrot.lane.b32.xlu0 %v247, 4
    %v250 = vpop.permute.xlu0 %249
    %252 = vrot.lane.b32.xlu0 %v247, 8
    %v253 = vpop.permute.xlu0 %252
    %255 = vrot.lane.b32.xlu0 %v247, 12
    %v256 = vpop.permute.xlu0 %255
    %258 = vrot.lane.b32.xlu0 %v247, 16
    %v259 = vpop.permute.xlu0 %258
    %261 = vrot.lane.b32.xlu0 %v247, 20
    %v262 = vpop.permute.xlu0 %261
    %264 = vrot.lane.b32.xlu0 %v247, 24
    %v265 = vpop.permute.xlu0 %264
    %267 = vrot.lane.b32.xlu0 %v247, 28
    %v268 = vpop.permute.xlu0 %267
    %v270 = vsel %vm52, %v247, %v250
    %v271 = vsel %vm54, %v270, %v253
    %v272 = vsel %vm56, %v271, %v256
    %v273 = vsel %vm58, %v272, %v259
    %v274 = vsel %vm60, %v273, %v262
    %v275 = vsel %vm62, %v274, %v265
    %v276 = vsel %vm64, %v275, %v268
    %s277 = scalar_lea.vmem %s0, 40
    %v278 = vld [vmem:[%s277] sm:$0xff]
    %v279 = vmul.f32 %v278, %v276
    %v280 = vsel %vm68, %v279, 0.0
    %v281 = vrot.slane %v280, 4
    %v282 = vadd.f32 %v280, %v281
    %v283 = vrot.slane %v282, 2
    %v284 = vadd.f32 %v282, %v283
    %v285 = vrot.slane %v284, 1
    %v286 = vadd.f32 %v284, %v285
    %287 = vst.msk [vmem:[#allocation2 + $0x5] sm:$0x1] %vm76, %v286
    %s288 = scalar_lea.vmem %s2, 48
    %v289 = vld [vmem:[%s288] sm:$0xff]
    %291 = vrot.lane.b32.xlu0 %v289, 4
    %v292 = vpop.permute.xlu0 %291
    %294 = vrot.lane.b32.xlu0 %v289, 8
    %v295 = vpop.permute.xlu0 %294
    %297 = vrot.lane.b32.xlu0 %v289, 12
    %v298 = vpop.permute.xlu0 %297
    %300 = vrot.lane.b32.xlu0 %v289, 16
    %v301 = vpop.permute.xlu0 %300
    %303 = vrot.lane.b32.xlu0 %v289, 20
    %v304 = vpop.permute.xlu0 %303
    %306 = vrot.lane.b32.xlu0 %v289, 24
    %v307 = vpop.permute.xlu0 %306
    %309 = vrot.lane.b32.xlu0 %v289, 28
    %v310 = vpop.permute.xlu0 %309
    %v312 = vsel %vm52, %v289, %v292
    %v313 = vsel %vm54, %v312, %v295
    %v314 = vsel %vm56, %v313, %v298
    %v315 = vsel %vm58, %v314, %v301
    %v316 = vsel %vm60, %v315, %v304
    %v317 = vsel %vm62, %v316, %v307
    %v318 = vsel %vm64, %v317, %v310
    %s319 = scalar_lea.vmem %s0, 48
    %v320 = vld [vmem:[%s319] sm:$0xff]
    %v321 = vmul.f32 %v320, %v318
    %v322 = vsel %vm68, %v321, 0.0
    %v323 = vrot.slane %v322, 4
    %v324 = vadd.f32 %v322, %v323
    %v325 = vrot.slane %v324, 2
    %v326 = vadd.f32 %v324, %v325
    %v327 = vrot.slane %v326, 1
    %v328 = vadd.f32 %v326, %v327
    %329 = vst.msk [vmem:[#allocation2 + $0x6] sm:$0x1] %vm76, %v328
    %s330 = scalar_lea.vmem %s2, 56
    %v331 = vld [vmem:[%s330] sm:$0xff]
    %333 = vrot.lane.b32.xlu0 %v331, 4
    %v334 = vpop.permute.xlu0 %333
    %336 = vrot.lane.b32.xlu0 %v331, 8
    %v337 = vpop.permute.xlu0 %336
    %339 = vrot.lane.b32.xlu0 %v331, 12
    %v340 = vpop.permute.xlu0 %339
    %342 = vrot.lane.b32.xlu0 %v331, 16
    %v343 = vpop.permute.xlu0 %342
    %345 = vrot.lane.b32.xlu0 %v331, 20
    %v346 = vpop.permute.xlu0 %345
    %348 = vrot.lane.b32.xlu0 %v331, 24
    %v349 = vpop.permute.xlu0 %348
    %351 = vrot.lane.b32.xlu0 %v331, 28
    %v352 = vpop.permute.xlu0 %351
    %v354 = vsel %vm52, %v331, %v334
    %v355 = vsel %vm54, %v354, %v337
    %v356 = vsel %vm56, %v355, %v340
    %v357 = vsel %vm58, %v356, %v343
    %v358 = vsel %vm60, %v357, %v346
    %v359 = vsel %vm62, %v358, %v349
    %v360 = vsel %vm64, %v359, %v352
    %s361 = scalar_lea.vmem %s0, 56
    %v362 = vld [vmem:[%s361] sm:$0xff]
    %v363 = vmul.f32 %v362, %v360
    %v364 = vsel %vm68, %v363, 0.0
    %v365 = vrot.slane %v364, 4
    %v366 = vadd.f32 %v364, %v365
    %v367 = vrot.slane %v366, 2
    %v368 = vadd.f32 %v366, %v367
    %v369 = vrot.slane %v368, 1
    %v370 = vadd.f32 %v368, %v369
    %371 = vst.msk [vmem:[#allocation2 + $0x7] sm:$0x1] %vm76, %v370
    %v372 = vld [vmem:[#allocation2] sm:$0x1]
    %373 = vst.msk [vmem:[#allocation6] sm:$0x1] %vm76, %v372
    %v375 = vrot.slane %v372, 7
    %376 = vrot.lane.b32.xlu0 %v375, 124
    %v377 = vpop.permute.xlu0 %376
    %v379 = vrot.slane %v372, 6
    %380 = vrot.lane.b32.xlu0 %v379, 120
    %v381 = vpop.permute.xlu0 %380
    %v383 = vrot.slane %v372, 5
    %384 = vrot.lane.b32.xlu0 %v383, 116
    %v385 = vpop.permute.xlu0 %384
    %v387 = vrot.slane %v372, 4
    %388 = vrot.lane.b32.xlu0 %v387, 112
    %v389 = vpop.permute.xlu0 %388
    %v391 = vrot.slane %v372, 3
    %392 = vrot.lane.b32.xlu0 %v391, 108
    %v393 = vpop.permute.xlu0 %392
    %v395 = vrot.slane %v372, 2
    %396 = vrot.lane.b32.xlu0 %v395, 104
    %v397 = vpop.permute.xlu0 %396
    %v399 = vrot.slane %v372, 1
    %400 = vrot.lane.b32.xlu0 %v399, 100
    %v401 = vpop.permute.xlu0 %400
    %vm403 = vcmask 1040384
    %v404 = vsel %vm403, %v372, %v377
    %vm405 = vcmask 1041408
    %v406 = vsel %vm405, %v404, %v381
    %vm407 = vcmask 1042432
    %v408 = vsel %vm407, %v406, %v385
    %vm409 = vcmask 1043456
    %v410 = vsel %vm409, %v408, %v389
    %vm411 = vcmask 1044480
    %v412 = vsel %vm411, %v410, %v393
    %vm413 = vcmask 1045504
    %v414 = vsel %vm413, %v412, %v397
    %vm415 = vcmask 1046528
    %v416 = vsel %vm415, %v414, %v401
    %418 = vrot.lane.b32.xlu0 %v416, 4
    %v419 = vpop.permute.xlu0 %418
    %421 = vrot.lane.b32.xlu0 %v416, 8
    %v422 = vpop.permute.xlu0 %421
    %424 = vrot.lane.b32.xlu0 %v416, 12
    %v425 = vpop.permute.xlu0 %424
    %427 = vrot.lane.b32.xlu0 %v416, 16
    %v428 = vpop.permute.xlu0 %427
    %430 = vrot.lane.b32.xlu0 %v416, 20
    %v431 = vpop.permute.xlu0 %430
    %433 = vrot.lane.b32.xlu0 %v416, 24
    %v434 = vpop.permute.xlu0 %433
    %436 = vrot.lane.b32.xlu0 %v416, 28
    %v437 = vpop.permute.xlu0 %436
    %v439 = vsel %vm52, %v416, %v419
    %v440 = vsel %vm54, %v439, %v422
    %v441 = vsel %vm56, %v440, %v425
    %v442 = vsel %vm58, %v441, %v428
    %v443 = vsel %vm60, %v442, %v431
    %v444 = vsel %vm62, %v443, %v434
    %v445 = vsel %vm64, %v444, %v437
    %v446 = vld [vmem:[#allocation2 + $0x1] sm:$0x1]
    %s447 = scalar_lea.vmem [#allocation3], 8
    %v448 = vld [vmem:[%s447] sm:$0xff]
    %v449 = vmul.f32 %v448, %v445
    %v450 = vsel %vm68, %v449, 0.0
    %v451 = vrot.slane %v450, 4
    %v452 = vadd.f32 %v450, %v451
    %v453 = vrot.slane %v452, 2
    %v454 = vadd.f32 %v452, %v453
    %v455 = vrot.slane %v454, 1
    %v456 = vadd.f32 %v454, %v455
    %v457 = vsub.f32 %v446, %v456
    %458 = vst.msk [vmem:[#allocation6 + $0x1] sm:$0x1] %vm76, %v457
    %v460 = vrot.slane %v457, 7
    %461 = vrot.lane.b32.xlu0 %v460, 124
    %v462 = vpop.permute.xlu0 %461
    %v464 = vrot.slane %v457, 6
    %465 = vrot.lane.b32.xlu0 %v464, 120
    %v466 = vpop.permute.xlu0 %465
    %v468 = vrot.slane %v457, 5
    %469 = vrot.lane.b32.xlu0 %v468, 116
    %v470 = vpop.permute.xlu0 %469
    %v472 = vrot.slane %v457, 4
    %473 = vrot.lane.b32.xlu0 %v472, 112
    %v474 = vpop.permute.xlu0 %473
    %v476 = vrot.slane %v457, 3
    %477 = vrot.lane.b32.xlu0 %v476, 108
    %v478 = vpop.permute.xlu0 %477
    %v480 = vrot.slane %v457, 2
    %481 = vrot.lane.b32.xlu0 %v480, 104
    %v482 = vpop.permute.xlu0 %481
    %v484 = vrot.slane %v457, 1
    %485 = vrot.lane.b32.xlu0 %v484, 100
    %v486 = vpop.permute.xlu0 %485
    %v488 = vsel %vm403, %v457, %v462
    %v489 = vsel %vm405, %v488, %v466
    %v490 = vsel %vm407, %v489, %v470
    %v491 = vsel %vm409, %v490, %v474
    %v492 = vsel %vm411, %v491, %v478
    %v493 = vsel %vm413, %v492, %v482
    %v494 = vsel %vm415, %v493, %v486
    %496 = vrot.lane.b32.xlu0 %v494, 4
    %v497 = vpop.permute.xlu0 %496
    %499 = vrot.lane.b32.xlu0 %v494, 8
    %v500 = vpop.permute.xlu0 %499
    %502 = vrot.lane.b32.xlu0 %v494, 12
    %v503 = vpop.permute.xlu0 %502
    %505 = vrot.lane.b32.xlu0 %v494, 16
    %v506 = vpop.permute.xlu0 %505
    %508 = vrot.lane.b32.xlu0 %v494, 20
    %v509 = vpop.permute.xlu0 %508
    %511 = vrot.lane.b32.xlu0 %v494, 24
    %v512 = vpop.permute.xlu0 %511
    %514 = vrot.lane.b32.xlu0 %v494, 28
    %v515 = vpop.permute.xlu0 %514
    %v517 = vsel %vm52, %v494, %v497
    %v518 = vsel %vm54, %v517, %v500
    %v519 = vsel %vm56, %v518, %v503
    %v520 = vsel %vm58, %v519, %v506
    %v521 = vsel %vm60, %v520, %v509
    %v522 = vsel %vm62, %v521, %v512
    %v523 = vsel %vm64, %v522, %v515
    %v524 = vld [vmem:[#allocation2 + $0x2] sm:$0x1]
    %s525 = scalar_lea.vmem [#allocation3], 16
    %v526 = vld [vmem:[%s525] sm:$0xff]
    %v527 = vmul.f32 %v526, %v523
    %v528 = vsel %vm68, %v527, 0.0
    %v529 = vrot.slane %v528, 4
    %v530 = vadd.f32 %v528, %v529
    %v531 = vrot.slane %v530, 2
    %v532 = vadd.f32 %v530, %v531
    %v533 = vrot.slane %v532, 1
    %v534 = vadd.f32 %v532, %v533
    %v535 = vsub.f32 %v524, %v534
    %536 = vst.msk [vmem:[#allocation6 + $0x2] sm:$0x1] %vm76, %v535
    %v538 = vrot.slane %v535, 7
    %539 = vrot.lane.b32.xlu0 %v538, 124
    %v540 = vpop.permute.xlu0 %539
    %v542 = vrot.slane %v535, 6
    %543 = vrot.lane.b32.xlu0 %v542, 120
    %v544 = vpop.permute.xlu0 %543
    %v546 = vrot.slane %v535, 5
    %547 = vrot.lane.b32.xlu0 %v546, 116
    %v548 = vpop.permute.xlu0 %547
    %v550 = vrot.slane %v535, 4
    %551 = vrot.lane.b32.xlu0 %v550, 112
    %v552 = vpop.permute.xlu0 %551
    %v554 = vrot.slane %v535, 3
    %555 = vrot.lane.b32.xlu0 %v554, 108
    %v556 = vpop.permute.xlu0 %555
    %v558 = vrot.slane %v535, 2
    %559 = vrot.lane.b32.xlu0 %v558, 104
    %v560 = vpop.permute.xlu0 %559
    %v562 = vrot.slane %v535, 1
    %563 = vrot.lane.b32.xlu0 %v562, 100
    %v564 = vpop.permute.xlu0 %563
    %v566 = vsel %vm403, %v535, %v540
    %v567 = vsel %vm405, %v566, %v544
    %v568 = vsel %vm407, %v567, %v548
    %v569 = vsel %vm409, %v568, %v552
    %v570 = vsel %vm411, %v569, %v556
    %v571 = vsel %vm413, %v570, %v560
    %v572 = vsel %vm415, %v571, %v564
    %574 = vrot.lane.b32.xlu0 %v572, 4
    %v575 = vpop.permute.xlu0 %574
    %577 = vrot.lane.b32.xlu0 %v572, 8
    %v578 = vpop.permute.xlu0 %577
    %580 = vrot.lane.b32.xlu0 %v572, 12
    %v581 = vpop.permute.xlu0 %580
    %583 = vrot.lane.b32.xlu0 %v572, 16
    %v584 = vpop.permute.xlu0 %583
    %586 = vrot.lane.b32.xlu0 %v572, 20
    %v587 = vpop.permute.xlu0 %586
    %589 = vrot.lane.b32.xlu0 %v572, 24
    %v590 = vpop.permute.xlu0 %589
    %592 = vrot.lane.b32.xlu0 %v572, 28
    %v593 = vpop.permute.xlu0 %592
    %v595 = vsel %vm52, %v572, %v575
    %v596 = vsel %vm54, %v595, %v578
    %v597 = vsel %vm56, %v596, %v581
    %v598 = vsel %vm58, %v597, %v584
    %v599 = vsel %vm60, %v598, %v587
    %v600 = vsel %vm62, %v599, %v590
    %v601 = vsel %vm64, %v600, %v593
    %v602 = vld [vmem:[#allocation2 + $0x3] sm:$0x1]
    %s603 = scalar_lea.vmem [#allocation3], 24
    %v604 = vld [vmem:[%s603] sm:$0xff]
    %v605 = vmul.f32 %v604, %v601
    %v606 = vsel %vm68, %v605, 0.0
    %v607 = vrot.slane %v606, 4
    %v608 = vadd.f32 %v606, %v607
    %v609 = vrot.slane %v608, 2
    %v610 = vadd.f32 %v608, %v609
    %v611 = vrot.slane %v610, 1
    %v612 = vadd.f32 %v610, %v611
    %v613 = vsub.f32 %v602, %v612
    %614 = vst.msk [vmem:[#allocation6 + $0x3] sm:$0x1] %vm76, %v613
    %v616 = vrot.slane %v613, 7
    %617 = vrot.lane.b32.xlu0 %v616, 124
    %v618 = vpop.permute.xlu0 %617
    %v620 = vrot.slane %v613, 6
    %621 = vrot.lane.b32.xlu0 %v620, 120
    %v622 = vpop.permute.xlu0 %621
    %v624 = vrot.slane %v613, 5
    %625 = vrot.lane.b32.xlu0 %v624, 116
    %v626 = vpop.permute.xlu0 %625
    %v628 = vrot.slane %v613, 4
    %629 = vrot.lane.b32.xlu0 %v628, 112
    %v630 = vpop.permute.xlu0 %629
    %v632 = vrot.slane %v613, 3
    %633 = vrot.lane.b32.xlu0 %v632, 108
    %v634 = vpop.permute.xlu0 %633
    %v636 = vrot.slane %v613, 2
    %637 = vrot.lane.b32.xlu0 %v636, 104
    %v638 = vpop.permute.xlu0 %637
    %v640 = vrot.slane %v613, 1
    %641 = vrot.lane.b32.xlu0 %v640, 100
    %v642 = vpop.permute.xlu0 %641
    %v644 = vsel %vm403, %v613, %v618
    %v645 = vsel %vm405, %v644, %v622
    %v646 = vsel %vm407, %v645, %v626
    %v647 = vsel %vm409, %v646, %v630
    %v648 = vsel %vm411, %v647, %v634
    %v649 = vsel %vm413, %v648, %v638
    %v650 = vsel %vm415, %v649, %v642
    %652 = vrot.lane.b32.xlu0 %v650, 4
    %v653 = vpop.permute.xlu0 %652
    %655 = vrot.lane.b32.xlu0 %v650, 8
    %v656 = vpop.permute.xlu0 %655
    %658 = vrot.lane.b32.xlu0 %v650, 12
    %v659 = vpop.permute.xlu0 %658
    %661 = vrot.lane.b32.xlu0 %v650, 16
    %v662 = vpop.permute.xlu0 %661
    %664 = vrot.lane.b32.xlu0 %v650, 20
    %v665 = vpop.permute.xlu0 %664
    %667 = vrot.lane.b32.xlu0 %v650, 24
    %v668 = vpop.permute.xlu0 %667
    %670 = vrot.lane.b32.xlu0 %v650, 28
    %v671 = vpop.permute.xlu0 %670
    %v673 = vsel %vm52, %v650, %v653
    %v674 = vsel %vm54, %v673, %v656
    %v675 = vsel %vm56, %v674, %v659
    %v676 = vsel %vm58, %v675, %v662
    %v677 = vsel %vm60, %v676, %v665
    %v678 = vsel %vm62, %v677, %v668
    %v679 = vsel %vm64, %v678, %v671
    %v680 = vld [vmem:[#allocation2 + $0x4] sm:$0x1]
    %s681 = scalar_lea.vmem [#allocation3], 32
    %v682 = vld [vmem:[%s681] sm:$0xff]
    %v683 = vmul.f32 %v682, %v679
    %v684 = vsel %vm68, %v683, 0.0
    %v685 = vrot.slane %v684, 4
    %v686 = vadd.f32 %v684, %v685
    %v687 = vrot.slane %v686, 2
    %v688 = vadd.f32 %v686, %v687
    %v689 = vrot.slane %v688, 1
    %v690 = vadd.f32 %v688, %v689
    %v691 = vsub.f32 %v680, %v690
    %692 = vst.msk [vmem:[#allocation6 + $0x4] sm:$0x1] %vm76, %v691
    %v694 = vrot.slane %v691, 7
    %695 = vrot.lane.b32.xlu0 %v694, 124
    %v696 = vpop.permute.xlu0 %695
    %v698 = vrot.slane %v691, 6
    %699 = vrot.lane.b32.xlu0 %v698, 120
    %v700 = vpop.permute.xlu0 %699
    %v702 = vrot.slane %v691, 5
    %703 = vrot.lane.b32.xlu0 %v702, 116
    %v704 = vpop.permute.xlu0 %703
    %v706 = vrot.slane %v691, 4
    %707 = vrot.lane.b32.xlu0 %v706, 112
    %v708 = vpop.permute.xlu0 %707
    %v710 = vrot.slane %v691, 3
    %711 = vrot.lane.b32.xlu0 %v710, 108
    %v712 = vpop.permute.xlu0 %711
    %v714 = vrot.slane %v691, 2
    %715 = vrot.lane.b32.xlu0 %v714, 104
    %v716 = vpop.permute.xlu0 %715
    %v718 = vrot.slane %v691, 1
    %719 = vrot.lane.b32.xlu0 %v718, 100
    %v720 = vpop.permute.xlu0 %719
    %v722 = vsel %vm403, %v691, %v696
    %v723 = vsel %vm405, %v722, %v700
    %v724 = vsel %vm407, %v723, %v704
    %v725 = vsel %vm409, %v724, %v708
    %v726 = vsel %vm411, %v725, %v712
    %v727 = vsel %vm413, %v726, %v716
    %v728 = vsel %vm415, %v727, %v720
    %730 = vrot.lane.b32.xlu0 %v728, 4
    %v731 = vpop.permute.xlu0 %730
    %733 = vrot.lane.b32.xlu0 %v728, 8
    %v734 = vpop.permute.xlu0 %733
    %736 = vrot.lane.b32.xlu0 %v728, 12
    %v737 = vpop.permute.xlu0 %736
    %739 = vrot.lane.b32.xlu0 %v728, 16
    %v740 = vpop.permute.xlu0 %739
    %742 = vrot.lane.b32.xlu0 %v728, 20
    %v743 = vpop.permute.xlu0 %742
    %745 = vrot.lane.b32.xlu0 %v728, 24
    %v746 = vpop.permute.xlu0 %745
    %748 = vrot.lane.b32.xlu0 %v728, 28
    %v749 = vpop.permute.xlu0 %748
    %v751 = vsel %vm52, %v728, %v731
    %v752 = vsel %vm54, %v751, %v734
    %v753 = vsel %vm56, %v752, %v737
    %v754 = vsel %vm58, %v753, %v740
    %v755 = vsel %vm60, %v754, %v743
    %v756 = vsel %vm62, %v755, %v746
    %v757 = vsel %vm64, %v756, %v749
    %v758 = vld [vmem:[#allocation2 + $0x5] sm:$0x1]
    %s759 = scalar_lea.vmem [#allocation3], 40
    %v760 = vld [vmem:[%s759] sm:$0xff]
    %v761 = vmul.f32 %v760, %v757
    %v762 = vsel %vm68, %v761, 0.0
    %v763 = vrot.slane %v762, 4
    %v764 = vadd.f32 %v762, %v763
    %v765 = vrot.slane %v764, 2
    %v766 = vadd.f32 %v764, %v765
    %v767 = vrot.slane %v766, 1
    %v768 = vadd.f32 %v766, %v767
    %v769 = vsub.f32 %v758, %v768
    %770 = vst.msk [vmem:[#allocation6 + $0x5] sm:$0x1] %vm76, %v769
    %v772 = vrot.slane %v769, 7
    %773 = vrot.lane.b32.xlu0 %v772, 124
    %v774 = vpop.permute.xlu0 %773
    %v776 = vrot.slane %v769, 6
    %777 = vrot.lane.b32.xlu0 %v776, 120
    %v778 = vpop.permute.xlu0 %777
    %v780 = vrot.slane %v769, 5
    %781 = vrot.lane.b32.xlu0 %v780, 116
    %v782 = vpop.permute.xlu0 %781
    %v784 = vrot.slane %v769, 4
    %785 = vrot.lane.b32.xlu0 %v784, 112
    %v786 = vpop.permute.xlu0 %785
    %v788 = vrot.slane %v769, 3
    %789 = vrot.lane.b32.xlu0 %v788, 108
    %v790 = vpop.permute.xlu0 %789
    %v792 = vrot.slane %v769, 2
    %793 = vrot.lane.b32.xlu0 %v792, 104
    %v794 = vpop.permute.xlu0 %793
    %v796 = vrot.slane %v769, 1
    %797 = vrot.lane.b32.xlu0 %v796, 100
    %v798 = vpop.permute.xlu0 %797
    %v800 = vsel %vm403, %v769, %v774
    %v801 = vsel %vm405, %v800, %v778
    %v802 = vsel %vm407, %v801, %v782
    %v803 = vsel %vm409, %v802, %v786
    %v804 = vsel %vm411, %v803, %v790
    %v805 = vsel %vm413, %v804, %v794
    %v806 = vsel %vm415, %v805, %v798
    %808 = vrot.lane.b32.xlu0 %v806, 4
    %v809 = vpop.permute.xlu0 %808
    %811 = vrot.lane.b32.xlu0 %v806, 8
    %v812 = vpop.permute.xlu0 %811
    %814 = vrot.lane.b32.xlu0 %v806, 12
    %v815 = vpop.permute.xlu0 %814
    %817 = vrot.lane.b32.xlu0 %v806, 16
    %v818 = vpop.permute.xlu0 %817
    %820 = vrot.lane.b32.xlu0 %v806, 20
    %v821 = vpop.permute.xlu0 %820
    %823 = vrot.lane.b32.xlu0 %v806, 24
    %v824 = vpop.permute.xlu0 %823
    %826 = vrot.lane.b32.xlu0 %v806, 28
    %v827 = vpop.permute.xlu0 %826
    %v829 = vsel %vm52, %v806, %v809
    %v830 = vsel %vm54, %v829, %v812
    %v831 = vsel %vm56, %v830, %v815
    %v832 = vsel %vm58, %v831, %v818
    %v833 = vsel %vm60, %v832, %v821
    %v834 = vsel %vm62, %v833, %v824
    %v835 = vsel %vm64, %v834, %v827
    %v836 = vld [vmem:[#allocation2 + $0x6] sm:$0x1]
    %s837 = scalar_lea.vmem [#allocation3], 48
    %v838 = vld [vmem:[%s837] sm:$0xff]
    %v839 = vmul.f32 %v838, %v835
    %v840 = vsel %vm68, %v839, 0.0
    %v841 = vrot.slane %v840, 4
    %v842 = vadd.f32 %v840, %v841
    %v843 = vrot.slane %v842, 2
    %v844 = vadd.f32 %v842, %v843
    %v845 = vrot.slane %v844, 1
    %v846 = vadd.f32 %v844, %v845
    %v847 = vsub.f32 %v836, %v846
    %848 = vst.msk [vmem:[#allocation6 + $0x6] sm:$0x1] %vm76, %v847
    %v850 = vrot.slane %v847, 7
    %851 = vrot.lane.b32.xlu0 %v850, 124
    %v852 = vpop.permute.xlu0 %851
    %v854 = vrot.slane %v847, 6
    %855 = vrot.lane.b32.xlu0 %v854, 120
    %v856 = vpop.permute.xlu0 %855
    %v858 = vrot.slane %v847, 5
    %859 = vrot.lane.b32.xlu0 %v858, 116
    %v860 = vpop.permute.xlu0 %859
    %v862 = vrot.slane %v847, 4
    %863 = vrot.lane.b32.xlu0 %v862, 112
    %v864 = vpop.permute.xlu0 %863
    %v866 = vrot.slane %v847, 3
    %867 = vrot.lane.b32.xlu0 %v866, 108
    %v868 = vpop.permute.xlu0 %867
    %v870 = vrot.slane %v847, 2
    %871 = vrot.lane.b32.xlu0 %v870, 104
    %v872 = vpop.permute.xlu0 %871
    %v874 = vrot.slane %v847, 1
    %875 = vrot.lane.b32.xlu0 %v874, 100
    %v876 = vpop.permute.xlu0 %875
    %v878 = vsel %vm403, %v847, %v852
    %v879 = vsel %vm405, %v878, %v856
    %v880 = vsel %vm407, %v879, %v860
    %v881 = vsel %vm409, %v880, %v864
    %v882 = vsel %vm411, %v881, %v868
    %v883 = vsel %vm413, %v882, %v872
    %v884 = vsel %vm415, %v883, %v876
    %886 = vrot.lane.b32.xlu0 %v884, 4
    %v887 = vpop.permute.xlu0 %886
    %889 = vrot.lane.b32.xlu0 %v884, 8
    %v890 = vpop.permute.xlu0 %889
    %892 = vrot.lane.b32.xlu0 %v884, 12
    %v893 = vpop.permute.xlu0 %892
    %895 = vrot.lane.b32.xlu0 %v884, 16
    %v896 = vpop.permute.xlu0 %895
    %898 = vrot.lane.b32.xlu0 %v884, 20
    %v899 = vpop.permute.xlu0 %898
    %901 = vrot.lane.b32.xlu0 %v884, 24
    %v902 = vpop.permute.xlu0 %901
    %904 = vrot.lane.b32.xlu0 %v884, 28
    %v905 = vpop.permute.xlu0 %904
    %v907 = vsel %vm52, %v884, %v887
    %v908 = vsel %vm54, %v907, %v890
    %v909 = vsel %vm56, %v908, %v893
    %v910 = vsel %vm58, %v909, %v896
    %v911 = vsel %vm60, %v910, %v899
    %v912 = vsel %vm62, %v911, %v902
    %v913 = vsel %vm64, %v912, %v905
    %v914 = vld [vmem:[#allocation2 + $0x7] sm:$0x1]
    %s915 = scalar_lea.vmem [#allocation3], 56
    %v916 = vld [vmem:[%s915] sm:$0xff]
    %v917 = vmul.f32 %v916, %v913
    %v918 = vsel %vm68, %v917, 0.0
    %v919 = vrot.slane %v918, 4
    %v920 = vadd.f32 %v918, %v919
    %v921 = vrot.slane %v920, 2
    %v922 = vadd.f32 %v920, %v921
    %v923 = vrot.slane %v922, 1
    %v924 = vadd.f32 %v922, %v923
    %v925 = vsub.f32 %v914, %v924
    %926 = vst.msk [vmem:[#allocation6 + $0x7] sm:$0x1] %vm76, %v925
    // Predicated region
    $region18: #{tpu_custom_call.1} parent=1 // pred_check
      _
    $region19: #{tpu_custom_call.1} parent=1 // pred_check_branch
      %928 = sbr.rel (0) target = $region21
    $region20: #{tpu_custom_call.1} parent=1 // pred_region
      %s930 = ssub.s32 128, 128
      %931 = vsyncadd [#allocation5], %s930
      %s933 = sshll.u32 [#allocation6], 4
      %s934 = int_to_ptr.vmem [resolvable:$true] %s933
      %936 = dma.vmem_to_hbm [thread:$0]  %s934, 128, %s3, [#allocation5]
    $region21: #{tpu_custom_call.1} parent=1 // pred_fallthru
      _
    // Predicated region
    $region22: #{tpu_custom_call.1} parent=1 // pred_check
      _
    $region23: #{tpu_custom_call.1} parent=1 // pred_check_branch
      %938 = sbr.rel (0) target = $region25
    $region24: #{tpu_custom_call.1} parent=1 // pred_region
      %939 = dma.done [#allocation5], 128
    $region25: #{tpu_custom_call.1} parent=1 // pred_fallthru
      _
    %940 = vsyncpa [#allocation4], 1
    %941 = vsyncpa [#allocation5], 1

</llo_original>
